<compile_context>
chip_gen: v5e
topology: v5e:2x2
jax: 0.10.0
libtpu: 0.0.40
codegen_flags: <defaults>
</compile_context>

<pallas_src>
import jax
import jax.numpy as jnp
import numpy as np
from jax.experimental import pallas as pl
from jax.experimental.pallas import tpu as pltpu

EPS = 1e-5
GELU_C = float(np.sqrt(2.0 / np.pi))


def _layer_norm(x, scale, shift):
    mean = jnp.mean(x, axis=-1, keepdims=True)
    var = jnp.mean((x - mean) ** 2, axis=-1, keepdims=True)   # unbiased=False
    return scale * ((x - mean) * jax.lax.rsqrt(var + EPS)) + shift


def _gelu_tanh(x):
    return 0.5 * x * (1.0 + jnp.tanh(GELU_C * (x + 0.044715 * x ** 3)))


def transformer_block_kernel(x_ref, ln1_s_ref, ln1_b_ref, ln2_s_ref, ln2_b_ref,
                             wq_ref, wk_ref, wv_ref, wo_ref,
                             w1_ref, b1_ref, w2_ref, b2_ref,
                             o_ref):
    f32 = jnp.float32
    bf16 = jnp.bfloat16

    x = x_ref[...].astype(f32)                    # (T, D), one batch element
    T, D = x.shape
    H = wq_ref.shape[0]                           # num heads (weights are head-major)

    # ---- LayerNorm 1 ----
    h = _layer_norm(x, ln1_s_ref[...], ln1_b_ref[...])

    # ---- Multi-head causal self-attention (all heads batched) ----
    # bf16 activations into the MXU, f32 accumulation.
    hb = jnp.broadcast_to(h.astype(bf16)[None], (H, T, D))        # (H, T, D)

    # Wq already carries the 1/sqrt(hd) scale (folded in the wrapper).
    q = jnp.einsum('htd,hdk->htk', hb, wq_ref[...], preferred_element_type=f32)
    k = jnp.einsum('htd,hdk->htk', hb, wk_ref[...], preferred_element_type=f32)
    v = jnp.einsum('htd,hdk->htk', hb, wv_ref[...], preferred_element_type=f32)

    rows = jax.lax.broadcasted_iota(jnp.int32, (T, T), 0)
    cols = jax.lax.broadcasted_iota(jnp.int32, (T, T), 1)
    mask_bias = jnp.where(cols > rows, f32(-1e30), f32(0.0))      # additive causal bias

    scores = jnp.einsum('hqd,hkd->hqk', q.astype(bf16), k.astype(bf16),
                        preferred_element_type=f32)               # (H, T, T)
    scores = scores + mask_bias                                    # broadcast over heads
    scores = scores - jnp.max(scores, axis=-1, keepdims=True)
    p = jnp.exp(scores)
    p = p * pl.reciprocal(jnp.sum(p, axis=-1, keepdims=True), approx=True)

    ctx = jnp.einsum('hqk,hkd->hqd', p.astype(bf16), v.astype(bf16),
                     preferred_element_type=f32)                  # (H, T, hd)

    # Output projection: concat-of-heads @ Wo  ==  sum_h ctx_h @ Wo_h
    attn_heads = jnp.einsum('hqd,hdn->hqn', ctx.astype(bf16), wo_ref[...],
                            preferred_element_type=f32)           # (H, T, D)
    attn_out = jnp.sum(attn_heads, axis=0)                        # (T, D)

    # TODO(synk): dropout (attention weights & residual) treated as identity (eval mode).
    x = attn_out + x                                              # residual 1

    # ---- LayerNorm 2 + FeedForward (GELU) ----
    h2 = _layer_norm(x, ln2_s_ref[...], ln2_b_ref[...])
    ff = jnp.dot(h2.astype(bf16), w1_ref[...],
                 preferred_element_type=f32) + b1_ref[...]
    ff = _gelu_tanh(ff)
    ff = jnp.dot(ff.astype(bf16), w2_ref[...],
                 preferred_element_type=f32) + b2_ref[...]

    o_ref[...] = (ff + x).astype(o_ref.dtype)                     # residual 2


def transformer_block(x, params, num_heads):
    """params are the module's canonical parameters (f32, PyTorch-equivalent layout,
    with every linear weight stored as (in_features, out_features))."""
    (ln1_s, ln1_b, ln2_s, ln2_b, wq, wk, wv, wo, w1, b1, w2, b2) = params
    B, T, D = x.shape
    H = num_heads
    hd = D // H
    H4 = w1.shape[1]

    inv_sqrt_hd = 1.0 / float(np.sqrt(hd))
    cast = lambda w: w.astype(jnp.bfloat16)

    def split_heads_in(w, scale=1.0):            # (D, D) -> (H, D, hd)
        return cast(jnp.transpose((w * scale).reshape(D, H, hd), (1, 0, 2)))

    # Head-major weight pre-split (done once, outside the kernel — free).
    wq_h = split_heads_in(wq, inv_sqrt_hd)       # fold 1/sqrt(hd) into Wq
    wk_h = split_heads_in(wk)
    wv_h = split_heads_in(wv)
    wo_h = cast(wo.reshape(H, hd, D))            # (H, hd, D)
    w1_b = cast(w1)
    w2_b = cast(w2)

    def inv2(shape):                             # grid-invariant 2-D block
        return pl.BlockSpec(shape, lambda b: (0, 0))

    def inv3(shape):                             # grid-invariant 3-D block
        return pl.BlockSpec(shape, lambda b: (0, 0, 0))

    in_specs = [
        pl.BlockSpec((None, T, D), lambda b: (b, 0, 0)),          # x, one batch element
        inv2((1, D)), inv2((1, D)),                               # ln1 scale / shift
        inv2((1, D)), inv2((1, D)),                               # ln2 scale / shift
        inv3((H, D, hd)), inv3((H, D, hd)), inv3((H, D, hd)),     # wq wk wv (head-major)
        inv3((H, hd, D)),                                         # wo (head-major)
        inv2((D, H4)), inv2((1, H4)),                             # ff w1, b1
        inv2((H4, D)), inv2((1, D)),                              # ff w2, b2
    ]
    out_specs = pl.BlockSpec((None, T, D), lambda b: (b, 0, 0))

    # Note: weight index_maps are constant, so Pallas only DMAs them once; at
    # production sizes add flash-style T tiling, FFN hidden chunking and
    # single-buffered weight specs to fit v7x's 64 MiB VMEM.
    return pl.pallas_call(
        transformer_block_kernel,
        out_shape=jax.ShapeDtypeStruct((B, T, D), x.dtype),
        grid=(B,),
        in_specs=in_specs,
        out_specs=out_specs,
        compiler_params=pltpu.CompilerParams(
            dimension_semantics=("parallel",),
            vmem_limit_bytes=64 * 1024 * 1024,
        ),
    )(x, ln1_s, ln1_b, ln2_s, ln2_b, wq_h, wk_h, wv_h, wo_h, w1_b, b1, w2_b, b2)


# ----------------- pure-JAX f32 reference (mirrors the PyTorch forward) -----------------
def transformer_block_ref(x, params, num_heads):
    (ln1_s, ln1_b, ln2_s, ln2_b, wq, wk, wv, wo, w1, b1, w2, b2) = params
    B, T, D = x.shape
    hd = D // num_heads

    def ln(y, s, b):
        m = jnp.mean(y, axis=-1, keepdims=True)
        v = jnp.mean((y - m) ** 2, axis=-1, keepdims=True)
        return s * ((y - m) / jnp.sqrt(EPS + v)) + b

    h = ln(x, ln1_s, ln1_b)
    q = (h @ wq).reshape(B, T, num_heads, hd).transpose(0, 2, 1, 3)
    k = (h @ wk).reshape(B, T, num_heads, hd).transpose(0, 2, 1, 3)
    v = (h @ wv).reshape(B, T, num_heads, hd).transpose(0, 2, 1, 3)
    scores = jnp.einsum('bhqd,bhkd->bhqk', q, k)
    mask = jnp.triu(jnp.ones((T, T), bool), k=1)
    scores = jnp.where(mask, -jnp.inf, scores)
    w = jax.nn.softmax(scores / np.sqrt(hd), axis=-1)
    ctx = jnp.einsum('bhqk,bhkd->bhqd', w, v).transpose(0, 2, 1, 3).reshape(B, T, D)
    x = ctx @ wo + x
    h2 = ln(x, ln2_s, ln2_b)
    ff = _gelu_tanh(h2 @ w1 + b1) @ w2 + b2
    return ff + x


if __name__ == "__main__":
    # cfg: emb_dim=32, context_length=8, n_heads=4, drop_rate=0.0 (eval), qkv_bias=False
    B, T, D, H = 2, 8, 32, 4
    key = jax.random.PRNGKey(0)
    ks = jax.random.split(key, 8)

    x = jax.random.normal(ks[0], (B, T, D), jnp.float32)

    params = (
        jnp.ones((1, D), jnp.float32),                                  # ln1 scale
        jnp.zeros((1, D), jnp.float32),                                 # ln1 shift
        jnp.ones((1, D), jnp.float32),                                  # ln2 scale
        jnp.zeros((1, D), jnp.float32),                                 # ln2 shift
        0.02 * jax.random.normal(ks[1], (D, D), jnp.float32),           # wq
        0.02 * jax.random.normal(ks[2], (D, D), jnp.float32),           # wk
        0.02 * jax.random.normal(ks[3], (D, D), jnp.float32),           # wv
        0.02 * jax.random.normal(ks[4], (D, D), jnp.float32),           # wo (out_proj)
        0.02 * jax.random.normal(ks[5], (D, 4 * D), jnp.float32),       # ff w1
        jnp.zeros((1, 4 * D), jnp.float32),                             # ff b1
        0.02 * jax.random.normal(ks[6], (4 * D, D), jnp.float32),       # ff w2
        jnp.zeros((1, D), jnp.float32),                                 # ff b2
    )

    out = jax.block_until_ready(transformer_block(x, params, H))
    ref = jax.block_until_ready(transformer_block_ref(x, params, H))
    # Tolerance accounts for bf16 MXU inputs (f32 accumulation) and the
    # approximate EUP reciprocal in the softmax; reference is pure f32.
    np.testing.assert_allclose(np.asarray(out), np.asarray(ref), rtol=2e-2, atol=2e-2)
    print("KERNEL_OK")
</pallas_src>

<mosaic_0001>
module attributes {stable_mosaic.version = 11 : i64} {
  func.func @transformer_block_kernel(%arg0: i32, %arg1: memref<1x8x32xf32, #tpu.memory_space<vmem>>, %arg2: memref<1x32xf32, #tpu.memory_space<vmem>>, %arg3: memref<1x32xf32, #tpu.memory_space<vmem>>, %arg4: memref<1x32xf32, #tpu.memory_space<vmem>>, %arg5: memref<1x32xf32, #tpu.memory_space<vmem>>, %arg6: memref<4x32x8xbf16, #tpu.memory_space<vmem>>, %arg7: memref<4x32x8xbf16, #tpu.memory_space<vmem>>, %arg8: memref<4x32x8xbf16, #tpu.memory_space<vmem>>, %arg9: memref<4x8x32xbf16, #tpu.memory_space<vmem>>, %arg10: memref<32x128xbf16, #tpu.memory_space<vmem>>, %arg11: memref<1x128xf32, #tpu.memory_space<vmem>>, %arg12: memref<128x32xbf16, #tpu.memory_space<vmem>>, %arg13: memref<1x32xf32, #tpu.memory_space<vmem>>, %arg14: memref<1x8x32xf32, #tpu.memory_space<vmem>>) attributes {dimension_semantics = [#tpu.dimension_semantics<parallel>], iteration_bounds = array<i64: 2>, scalar_prefetch = 0 : i64, scratch_operands = 0 : i64, tpu.core_type = #tpu.core_type<tc>, window_params = [{transform_indices = @transform_0, window_bounds = array<i64: 1, 8, 32>}, {pipeline_mode = #tpu.pipeline_mode<synchronous>, transform_indices = @transform_1, window_bounds = array<i64: 1, 32>}, {pipeline_mode = #tpu.pipeline_mode<synchronous>, transform_indices = @transform_2, window_bounds = array<i64: 1, 32>}, {pipeline_mode = #tpu.pipeline_mode<synchronous>, transform_indices = @transform_3, window_bounds = array<i64: 1, 32>}, {pipeline_mode = #tpu.pipeline_mode<synchronous>, transform_indices = @transform_4, window_bounds = array<i64: 1, 32>}, {pipeline_mode = #tpu.pipeline_mode<synchronous>, transform_indices = @transform_5, window_bounds = array<i64: 4, 32, 8>}, {pipeline_mode = #tpu.pipeline_mode<synchronous>, transform_indices = @transform_6, window_bounds = array<i64: 4, 32, 8>}, {pipeline_mode = #tpu.pipeline_mode<synchronous>, transform_indices = @transform_7, window_bounds = array<i64: 4, 32, 8>}, {pipeline_mode = #tpu.pipeline_mode<synchronous>, transform_indices = @transform_8, window_bounds = array<i64: 4, 8, 32>}, {pipeline_mode = #tpu.pipeline_mode<synchronous>, transform_indices = @transform_9, window_bounds = array<i64: 32, 128>}, {pipeline_mode = #tpu.pipeline_mode<synchronous>, transform_indices = @transform_10, window_bounds = array<i64: 1, 128>}, {pipeline_mode = #tpu.pipeline_mode<synchronous>, transform_indices = @transform_11, window_bounds = array<i64: 128, 32>}, {pipeline_mode = #tpu.pipeline_mode<synchronous>, transform_indices = @transform_12, window_bounds = array<i64: 1, 32>}, {transform_indices = @transform_13, window_bounds = array<i64: 1, 8, 32>}]} {
    %c0 = arith.constant 0 : index
    %c0_0 = arith.constant 0 : index
    %c0_1 = arith.constant 0 : index
    %0 = vector.load %arg1[%c0, %c0_0, %c0_1] : memref<1x8x32xf32, #tpu.memory_space<vmem>>, vector<1x8x32xf32>
    %1 = vector.shape_cast %0 : vector<1x8x32xf32> to vector<8x32xf32>
    %c0_2 = arith.constant 0 : index
    %c0_3 = arith.constant 0 : index
    %2 = vector.load %arg2[%c0_2, %c0_3] : memref<1x32xf32, #tpu.memory_space<vmem>>, vector<1x32xf32>
    %c0_4 = arith.constant 0 : index
    %c0_5 = arith.constant 0 : index
    %3 = vector.load %arg3[%c0_4, %c0_5] : memref<1x32xf32, #tpu.memory_space<vmem>>, vector<1x32xf32>
    %cst = arith.constant dense<0.000000e+00> : vector<8xf32>
    %4 = vector.multi_reduction <add>, %1, %cst [1] : vector<8x32xf32> to vector<8xf32>
    %5 = vector.shape_cast %4 : vector<8xf32> to vector<8x1xf32>
    %cst_6 = arith.constant 3.200000e+01 : f32
    %6 = vector.broadcast %cst_6 : f32 to vector<8x1xf32>
    %7 = arith.divf %5, %6 : vector<8x1xf32>
    %8 = vector.broadcast %7 : vector<8x1xf32> to vector<8x32xf32>
    %9 = arith.subf %1, %8 : vector<8x32xf32>
    %10 = arith.mulf %9, %9 : vector<8x32xf32>
    %cst_7 = arith.constant dense<0.000000e+00> : vector<8xf32>
    %11 = vector.multi_reduction <add>, %10, %cst_7 [1] : vector<8x32xf32> to vector<8xf32>
    %12 = vector.shape_cast %11 : vector<8xf32> to vector<8x1xf32>
    %cst_8 = arith.constant 3.200000e+01 : f32
    %13 = vector.broadcast %cst_8 : f32 to vector<8x1xf32>
    %14 = arith.divf %12, %13 : vector<8x1xf32>
    %15 = vector.broadcast %7 : vector<8x1xf32> to vector<8x32xf32>
    %16 = arith.subf %1, %15 : vector<8x32xf32>
    %cst_9 = arith.constant 9.99999974E-6 : f32
    %17 = vector.broadcast %cst_9 : f32 to vector<8x1xf32>
    %18 = arith.addf %14, %17 : vector<8x1xf32>
    %19 = math.rsqrt %18 : vector<8x1xf32>
    %20 = vector.broadcast %19 : vector<8x1xf32> to vector<8x32xf32>
    %21 = arith.mulf %16, %20 : vector<8x32xf32>
    %22 = vector.broadcast %2 : vector<1x32xf32> to vector<8x32xf32>
    %23 = arith.mulf %22, %21 : vector<8x32xf32>
    %24 = vector.broadcast %3 : vector<1x32xf32> to vector<8x32xf32>
    %25 = arith.addf %23, %24 : vector<8x32xf32>
    %26 = arith.truncf %25 : vector<8x32xf32> to vector<8x32xbf16>
    %27 = vector.shape_cast %26 : vector<8x32xbf16> to vector<1x8x32xbf16>
    %28 = vector.shape_cast %27 : vector<1x8x32xbf16> to vector<1x8x32xbf16>
    %29 = vector.broadcast %28 : vector<1x8x32xbf16> to vector<4x8x32xbf16>
    %c0_10 = arith.constant 0 : index
    %c0_11 = arith.constant 0 : index
    %c0_12 = arith.constant 0 : index
    %30 = vector.load %arg6[%c0_10, %c0_11, %c0_12] : memref<4x32x8xbf16, #tpu.memory_space<vmem>>, vector<4x32x8xbf16>
    "tpu.trace_start"() <{level = 10 : i32, message = "htd,hdk->htk"}> : () -> ()
    %cst_13 = arith.constant dense<0.000000e+00> : vector<4x8x8xf32>
    %31 = tpu.matmul %29, %30, %cst_13 {dimension_numbers = #tpu.dot_dimension_numbers<[2], [1], [1], [2], [0, 0, 0, 1, 1, 2], [0], [0]>} : vector<4x8x32xbf16>, vector<4x32x8xbf16>, vector<4x8x8xf32> -> vector<4x8x8xf32>
    "tpu.trace_stop"() : () -> ()
    %c0_14 = arith.constant 0 : index
    %c0_15 = arith.constant 0 : index
    %c0_16 = arith.constant 0 : index
    %32 = vector.load %arg7[%c0_14, %c0_15, %c0_16] : memref<4x32x8xbf16, #tpu.memory_space<vmem>>, vector<4x32x8xbf16>
    "tpu.trace_start"() <{level = 10 : i32, message = "htd,hdk->htk"}> : () -> ()
    %cst_17 = arith.constant dense<0.000000e+00> : vector<4x8x8xf32>
    %33 = tpu.matmul %29, %32, %cst_17 {dimension_numbers = #tpu.dot_dimension_numbers<[2], [1], [1], [2], [0, 0, 0, 1, 1, 2], [0], [0]>} : vector<4x8x32xbf16>, vector<4x32x8xbf16>, vector<4x8x8xf32> -> vector<4x8x8xf32>
    "tpu.trace_stop"() : () -> ()
    %c0_18 = arith.constant 0 : index
    %c0_19 = arith.constant 0 : index
    %c0_20 = arith.constant 0 : index
    %34 = vector.load %arg8[%c0_18, %c0_19, %c0_20] : memref<4x32x8xbf16, #tpu.memory_space<vmem>>, vector<4x32x8xbf16>
    "tpu.trace_start"() <{level = 10 : i32, message = "htd,hdk->htk"}> : () -> ()
    %cst_21 = arith.constant dense<0.000000e+00> : vector<4x8x8xf32>
    %35 = tpu.matmul %29, %34, %cst_21 {dimension_numbers = #tpu.dot_dimension_numbers<[2], [1], [1], [2], [0, 0, 0, 1, 1, 2], [0], [0]>} : vector<4x8x32xbf16>, vector<4x32x8xbf16>, vector<4x8x8xf32> -> vector<4x8x8xf32>
    "tpu.trace_stop"() : () -> ()
    %36 = tpu.iota {dimensions = array<i32: 0>} : vector<8x8xi32>
    %37 = tpu.iota {dimensions = array<i32: 1>} : vector<8x8xi32>
    %38 = arith.cmpi sgt, %37, %36 : vector<8x8xi32>
    %cst_22 = arith.constant -1.000000e+30 : f32
    %cst_23 = arith.constant 0.000000e+00 : f32
    %39 = vector.broadcast %cst_22 : f32 to vector<8x8xf32>
    %40 = vector.broadcast %cst_23 : f32 to vector<8x8xf32>
    %41 = arith.select %38, %39, %40 : vector<8x8xi1>, vector<8x8xf32>
    %42 = arith.truncf %31 : vector<4x8x8xf32> to vector<4x8x8xbf16>
    %43 = arith.truncf %33 : vector<4x8x8xf32> to vector<4x8x8xbf16>
    "tpu.trace_start"() <{level = 10 : i32, message = "hqd,hkd->hqk"}> : () -> ()
    %cst_24 = arith.constant dense<0.000000e+00> : vector<4x8x8xf32>
    %44 = tpu.matmul %42, %43, %cst_24 {dimension_numbers = #tpu.dot_dimension_numbers<[2], [2], [1], [1], [0, 0, 0, 1, 1, 1], [0], [0]>} : vector<4x8x8xbf16>, vector<4x8x8xbf16>, vector<4x8x8xf32> -> vector<4x8x8xf32>
    "tpu.trace_stop"() : () -> ()
    %45 = vector.shape_cast %41 : vector<8x8xf32> to vector<1x8x8xf32>
    %46 = vector.broadcast %45 : vector<1x8x8xf32> to vector<4x8x8xf32>
    %47 = arith.addf %44, %46 : vector<4x8x8xf32>
    %cst_25 = arith.constant dense<0xFF800000> : vector<4x8xf32>
    %48 = vector.multi_reduction <maximumf>, %47, %cst_25 [2] : vector<4x8x8xf32> to vector<4x8xf32>
    %49 = vector.shape_cast %48 : vector<4x8xf32> to vector<4x8x1xf32>
    %50 = vector.broadcast %49 : vector<4x8x1xf32> to vector<4x8x8xf32>
    %51 = arith.subf %47, %50 : vector<4x8x8xf32>
    %52 = math.exp %51 : vector<4x8x8xf32>
    %cst_26 = arith.constant dense<0.000000e+00> : vector<4x8xf32>
    %53 = vector.multi_reduction <add>, %52, %cst_26 [2] : vector<4x8x8xf32> to vector<4x8xf32>
    %54 = vector.shape_cast %53 : vector<4x8xf32> to vector<4x8x1xf32>
    %55 = tpu.reciprocal %54 {approx = true} : vector<4x8x1xf32> -> vector<4x8x1xf32>
    %56 = vector.broadcast %55 : vector<4x8x1xf32> to vector<4x8x8xf32>
    %57 = arith.mulf %52, %56 : vector<4x8x8xf32>
    %58 = arith.truncf %57 : vector<4x8x8xf32> to vector<4x8x8xbf16>
    %59 = arith.truncf %35 : vector<4x8x8xf32> to vector<4x8x8xbf16>
    "tpu.trace_start"() <{level = 10 : i32, message = "hqk,hkd->hqd"}> : () -> ()
    %cst_27 = arith.constant dense<0.000000e+00> : vector<4x8x8xf32>
    %60 = tpu.matmul %58, %59, %cst_27 {dimension_numbers = #tpu.dot_dimension_numbers<[2], [1], [1], [2], [0, 0, 0, 1, 1, 2], [0], [0]>} : vector<4x8x8xbf16>, vector<4x8x8xbf16>, vector<4x8x8xf32> -> vector<4x8x8xf32>
    "tpu.trace_stop"() : () -> ()
    %61 = arith.truncf %60 : vector<4x8x8xf32> to vector<4x8x8xbf16>
    %c0_28 = arith.constant 0 : index
    %c0_29 = arith.constant 0 : index
    %c0_30 = arith.constant 0 : index
    %62 = vector.load %arg9[%c0_28, %c0_29, %c0_30] : memref<4x8x32xbf16, #tpu.memory_space<vmem>>, vector<4x8x32xbf16>
    "tpu.trace_start"() <{level = 10 : i32, message = "hqd,hdn->hqn"}> : () -> ()
    %cst_31 = arith.constant dense<0.000000e+00> : vector<4x8x32xf32>
    %63 = tpu.matmul %61, %62, %cst_31 {dimension_numbers = #tpu.dot_dimension_numbers<[2], [1], [1], [2], [0, 0, 0, 1, 1, 2], [0], [0]>} : vector<4x8x8xbf16>, vector<4x8x32xbf16>, vector<4x8x32xf32> -> vector<4x8x32xf32>
    "tpu.trace_stop"() : () -> ()
    %cst_32 = arith.constant dense<0.000000e+00> : vector<8x32xf32>
    %64 = vector.multi_reduction <add>, %63, %cst_32 [0] : vector<4x8x32xf32> to vector<8x32xf32>
    %65 = arith.addf %64, %1 : vector<8x32xf32>
    %c0_33 = arith.constant 0 : index
    %c0_34 = arith.constant 0 : index
    %66 = vector.load %arg4[%c0_33, %c0_34] : memref<1x32xf32, #tpu.memory_space<vmem>>, vector<1x32xf32>
    %c0_35 = arith.constant 0 : index
    %c0_36 = arith.constant 0 : index
    %67 = vector.load %arg5[%c0_35, %c0_36] : memref<1x32xf32, #tpu.memory_space<vmem>>, vector<1x32xf32>
    %cst_37 = arith.constant dense<0.000000e+00> : vector<8xf32>
    %68 = vector.multi_reduction <add>, %65, %cst_37 [1] : vector<8x32xf32> to vector<8xf32>
    %69 = vector.shape_cast %68 : vector<8xf32> to vector<8x1xf32>
    %cst_38 = arith.constant 3.200000e+01 : f32
    %70 = vector.broadcast %cst_38 : f32 to vector<8x1xf32>
    %71 = arith.divf %69, %70 : vector<8x1xf32>
    %72 = vector.broadcast %71 : vector<8x1xf32> to vector<8x32xf32>
    %73 = arith.subf %65, %72 : vector<8x32xf32>
    %74 = arith.mulf %73, %73 : vector<8x32xf32>
    %cst_39 = arith.constant dense<0.000000e+00> : vector<8xf32>
    %75 = vector.multi_reduction <add>, %74, %cst_39 [1] : vector<8x32xf32> to vector<8xf32>
    %76 = vector.shape_cast %75 : vector<8xf32> to vector<8x1xf32>
    %cst_40 = arith.constant 3.200000e+01 : f32
    %77 = vector.broadcast %cst_40 : f32 to vector<8x1xf32>
    %78 = arith.divf %76, %77 : vector<8x1xf32>
    %79 = vector.broadcast %71 : vector<8x1xf32> to vector<8x32xf32>
    %80 = arith.subf %65, %79 : vector<8x32xf32>
    %cst_41 = arith.constant 9.99999974E-6 : f32
    %81 = vector.broadcast %cst_41 : f32 to vector<8x1xf32>
    %82 = arith.addf %78, %81 : vector<8x1xf32>
    %83 = math.rsqrt %82 : vector<8x1xf32>
    %84 = vector.broadcast %83 : vector<8x1xf32> to vector<8x32xf32>
    %85 = arith.mulf %80, %84 : vector<8x32xf32>
    %86 = vector.broadcast %66 : vector<1x32xf32> to vector<8x32xf32>
    %87 = arith.mulf %86, %85 : vector<8x32xf32>
    %88 = vector.broadcast %67 : vector<1x32xf32> to vector<8x32xf32>
    %89 = arith.addf %87, %88 : vector<8x32xf32>
    %90 = arith.truncf %89 : vector<8x32xf32> to vector<8x32xbf16>
    %c0_42 = arith.constant 0 : index
    %c0_43 = arith.constant 0 : index
    %91 = vector.load %arg10[%c0_42, %c0_43] : memref<32x128xbf16, #tpu.memory_space<vmem>>, vector<32x128xbf16>
    %cst_44 = arith.constant dense<0.000000e+00> : vector<8x128xf32>
    %92 = tpu.matmul %90, %91, %cst_44 {dimension_numbers = #tpu.dot_dimension_numbers<[1], [0], [0], [1], [0, 0, 1, 1], [], []>} : vector<8x32xbf16>, vector<32x128xbf16>, vector<8x128xf32> -> vector<8x128xf32>
    %c0_45 = arith.constant 0 : index
    %c0_46 = arith.constant 0 : index
    %93 = vector.load %arg11[%c0_45, %c0_46] : memref<1x128xf32, #tpu.memory_space<vmem>>, vector<1x128xf32>
    %94 = vector.broadcast %93 : vector<1x128xf32> to vector<8x128xf32>
    %95 = arith.addf %92, %94 : vector<8x128xf32>
    %cst_47 = arith.constant 5.000000e-01 : f32
    %96 = vector.broadcast %cst_47 : f32 to vector<8x128xf32>
    %97 = arith.mulf %96, %95 : vector<8x128xf32>
    %98 = arith.mulf %95, %95 : vector<8x128xf32>
    %99 = arith.mulf %95, %98 : vector<8x128xf32>
    %cst_48 = arith.constant 4.471500e-02 : f32
    %100 = vector.broadcast %cst_48 : f32 to vector<8x128xf32>
    %101 = arith.mulf %100, %99 : vector<8x128xf32>
    %102 = arith.addf %95, %101 : vector<8x128xf32>
    %cst_49 = arith.constant 0.797884583 : f32
    %103 = vector.broadcast %cst_49 : f32 to vector<8x128xf32>
    %104 = arith.mulf %103, %102 : vector<8x128xf32>
    %105 = math.tanh %104 : vector<8x128xf32>
    %cst_50 = arith.constant 1.000000e+00 : f32
    %106 = vector.broadcast %cst_50 : f32 to vector<8x128xf32>
    %107 = arith.addf %106, %105 : vector<8x128xf32>
    %108 = arith.mulf %97, %107 : vector<8x128xf32>
    %109 = arith.truncf %108 : vector<8x128xf32> to vector<8x128xbf16>
    %c0_51 = arith.constant 0 : index
    %c0_52 = arith.constant 0 : index
    %110 = vector.load %arg12[%c0_51, %c0_52] : memref<128x32xbf16, #tpu.memory_space<vmem>>, vector<128x32xbf16>
    %cst_53 = arith.constant dense<0.000000e+00> : vector<8x32xf32>
    %111 = tpu.matmul %109, %110, %cst_53 {dimension_numbers = #tpu.dot_dimension_numbers<[1], [0], [0], [1], [0, 0, 1, 1], [], []>} : vector<8x128xbf16>, vector<128x32xbf16>, vector<8x32xf32> -> vector<8x32xf32>
    %c0_54 = arith.constant 0 : index
    %c0_55 = arith.constant 0 : index
    %112 = vector.load %arg13[%c0_54, %c0_55] : memref<1x32xf32, #tpu.memory_space<vmem>>, vector<1x32xf32>
    %113 = vector.broadcast %112 : vector<1x32xf32> to vector<8x32xf32>
    %114 = arith.addf %111, %113 : vector<8x32xf32>
    %115 = arith.addf %114, %65 : vector<8x32xf32>
    %c0_56 = arith.constant 0 : index
    %c0_57 = arith.constant 0 : index
    %c0_58 = arith.constant 0 : index
    %116 = vector.load %arg14[%c0_56, %c0_57, %c0_58] : memref<1x8x32xf32, #tpu.memory_space<vmem>>, vector<1x8x32xf32>
    %117 = vector.shape_cast %116 : vector<1x8x32xf32> to vector<8x32xf32>
    %118 = vector.shape_cast %115 : vector<8x32xf32> to vector<1x8x32xf32>
    tpu.vector_store %arg14[%c0_56, %c0_57, %c0_58], %118 {strides = array<i32>} : memref<1x8x32xf32, #tpu.memory_space<vmem>>, vector<1x8x32xf32>,
    return
  }
  func.func @transform_0(%arg0: i32) -> (i32, i32, i32) {
    %c0_i32 = arith.constant 0 : i32
    %c0_i32_0 = arith.constant 0 : i32
    %c0_i32_1 = arith.constant 0 : i32
    return %arg0, %c0_i32, %c0_i32_0 : i32, i32, i32
  }
  func.func @transform_1(%arg0: i32) -> (i32, i32) {
    %c0_i32 = arith.constant 0 : i32
    %c0_i32_0 = arith.constant 0 : i32
    %c0_i32_1 = arith.constant 0 : i32
    return %c0_i32, %c0_i32_0 : i32, i32
  }
  func.func @transform_2(%arg0: i32) -> (i32, i32) {
    %c0_i32 = arith.constant 0 : i32
    %c0_i32_0 = arith.constant 0 : i32
    %c0_i32_1 = arith.constant 0 : i32
    return %c0_i32, %c0_i32_0 : i32, i32
  }
  func.func @transform_3(%arg0: i32) -> (i32, i32) {
    %c0_i32 = arith.constant 0 : i32
    %c0_i32_0 = arith.constant 0 : i32
    %c0_i32_1 = arith.constant 0 : i32
    return %c0_i32, %c0_i32_0 : i32, i32
  }
  func.func @transform_4(%arg0: i32) -> (i32, i32) {
    %c0_i32 = arith.constant 0 : i32
    %c0_i32_0 = arith.constant 0 : i32
    %c0_i32_1 = arith.constant 0 : i32
    return %c0_i32, %c0_i32_0 : i32, i32
  }
  func.func @transform_5(%arg0: i32) -> (i32, i32, i32) {
    %c0_i32 = arith.constant 0 : i32
    %c0_i32_0 = arith.constant 0 : i32
    %c0_i32_1 = arith.constant 0 : i32
    %c0_i32_2 = arith.constant 0 : i32
    return %c0_i32, %c0_i32_0, %c0_i32_1 : i32, i32, i32
  }
  func.func @transform_6(%arg0: i32) -> (i32, i32, i32) {
    %c0_i32 = arith.constant 0 : i32
    %c0_i32_0 = arith.constant 0 : i32
    %c0_i32_1 = arith.constant 0 : i32
    %c0_i32_2 = arith.constant 0 : i32
    return %c0_i32, %c0_i32_0, %c0_i32_1 : i32, i32, i32
  }
  func.func @transform_7(%arg0: i32) -> (i32, i32, i32) {
    %c0_i32 = arith.constant 0 : i32
    %c0_i32_0 = arith.constant 0 : i32
    %c0_i32_1 = arith.constant 0 : i32
    %c0_i32_2 = arith.constant 0 : i32
    return %c0_i32, %c0_i32_0, %c0_i32_1 : i32, i32, i32
  }
  func.func @transform_8(%arg0: i32) -> (i32, i32, i32) {
    %c0_i32 = arith.constant 0 : i32
    %c0_i32_0 = arith.constant 0 : i32
    %c0_i32_1 = arith.constant 0 : i32
    %c0_i32_2 = arith.constant 0 : i32
    return %c0_i32, %c0_i32_0, %c0_i32_1 : i32, i32, i32
  }
  func.func @transform_9(%arg0: i32) -> (i32, i32) {
    %c0_i32 = arith.constant 0 : i32
    %c0_i32_0 = arith.constant 0 : i32
    %c0_i32_1 = arith.constant 0 : i32
    return %c0_i32, %c0_i32_0 : i32, i32
  }
  func.func @transform_10(%arg0: i32) -> (i32, i32) {
    %c0_i32 = arith.constant 0 : i32
    %c0_i32_0 = arith.constant 0 : i32
    %c0_i32_1 = arith.constant 0 : i32
    return %c0_i32, %c0_i32_0 : i32, i32
  }
  func.func @transform_11(%arg0: i32) -> (i32, i32) {
    %c0_i32 = arith.constant 0 : i32
    %c0_i32_0 = arith.constant 0 : i32
    %c0_i32_1 = arith.constant 0 : i32
    return %c0_i32, %c0_i32_0 : i32, i32
  }
  func.func @transform_12(%arg0: i32) -> (i32, i32) {
    %c0_i32 = arith.constant 0 : i32
    %c0_i32_0 = arith.constant 0 : i32
    %c0_i32_1 = arith.constant 0 : i32
    return %c0_i32, %c0_i32_0 : i32, i32
  }
  func.func @transform_13(%arg0: i32) -> (i32, i32, i32) {
    %c0_i32 = arith.constant 0 : i32
    %c0_i32_0 = arith.constant 0 : i32
    %c0_i32_1 = arith.constant 0 : i32
    return %arg0, %c0_i32, %c0_i32_0 : i32, i32, i32
  }
}

</mosaic_0001>

<llo_original>
// kernel: tpu_custom_call.1
$region0: #{tpu_custom_call.1}
  #allocation0 [shape = 'u32[]', space=smem, size = 0x4, offset = 0x4, fixed_abs, tag = 'smem constant byte address 0x4 - core index']
  #allocation1 [shape = 'u32[72,128]{1,0:T(1,128)}', space=vmem, size = 0x9000, scoped, tag = 'internal scratch']
  %s0 = inlined_call_operand.vmem [shape: f32[2,8,32], index: 0, kind: input, shape index: {}]
  %s1 = inlined_call_operand.vmem [shape: f32[1,32], index: 1, kind: input, shape index: {}]
  %s2 = inlined_call_operand.vmem [shape: f32[1,32], index: 2, kind: input, shape index: {}]
  %s3 = inlined_call_operand.vmem [shape: f32[1,32], index: 3, kind: input, shape index: {}]
  %s4 = inlined_call_operand.vmem [shape: f32[1,32], index: 4, kind: input, shape index: {}]
  %s5 = inlined_call_operand.vmem [shape: bf16[4,32,8], index: 5, kind: input, shape index: {}]
  %s6 = inlined_call_operand.vmem [shape: bf16[4,32,8], index: 6, kind: input, shape index: {}]
  %s7 = inlined_call_operand.vmem [shape: bf16[4,32,8], index: 7, kind: input, shape index: {}]
  %s8 = inlined_call_operand.vmem [shape: bf16[4,8,32], index: 8, kind: input, shape index: {}]
  %s9 = inlined_call_operand.vmem [shape: bf16[32,128], index: 9, kind: input, shape index: {}]
  %s10 = inlined_call_operand.vmem [shape: f32[1,128], index: 10, kind: input, shape index: {}]
  %s11 = inlined_call_operand.vmem [shape: bf16[128,32], index: 11, kind: input, shape index: {}]
  %s12 = inlined_call_operand.vmem [shape: f32[1,32], index: 12, kind: input, shape index: {}]
  %s13 = inlined_call_operand.hbm [shape: f32[2,8,32], index: 13, kind: output, shape index: {}]
  %s14 = sld [smem:[#allocation0]]
  $region85: #{tpu_custom_call.1} parent=0
    _
  %s16 = ssub.s32 1, %s14
  %s17 = scalar_select 0, %s16, %s14
  $region1: #{tpu_custom_call.1} parent=0
    #allocation2 [shape = 'u8[8192]{0}', space=vmem, size = 0x2000, scoped, tag = 'output window, operand 0']
    #allocation3 [shape = 's32[2]{0}', space=sflag, size = 0x8, scoped, tag = 'scoped memory for tpu_custom_call.1']
    %18 = vsyncpa [#allocation3], 0
    %s19 = scalar_lea.sflag [#allocation3], 1
    %20 = vsyncpa %s19, 0
    loop: start=0, step=1, limit=4
    $region2: #{tpu_custom_call.1} parent=1 // loop_pre_header
      _
    $region3: #{tpu_custom_call.1} parent=1 // loop_header
      %s22 = sphi 0, %s26
      %p23 = scmp.ge.s32.totalorder %s22, 4
      %s32 = sphi 0, %s34
      %s35 = sphi 0, %s32
      %s36 = sphi 0, %s35
      %s52 = sphi 0, %s36
      %s56 = sphi 0, %s56
      %s58 = sphi 0, %s56
      %s59 = sphi 0, %s58
      %s73 = sphi 0, %s59
      %s77 = sphi 0, %s77
      %s79 = sphi 0, %s77
      %s80 = sphi 0, %s79
      %s94 = sphi 0, %s80
      %s98 = sphi 0, %s98
      %s100 = sphi 0, %s98
      %s101 = sphi 0, %s100
      %s115 = sphi 0, %s101
      %s119 = sphi 0, %s119
      %s121 = sphi 0, %s119
      %s122 = sphi 0, %s121
      %s136 = sphi 0, %s122
      %s140 = sphi 0, %s140
      %s142 = sphi 0, %s140
      %s143 = sphi 0, %s142
      %s157 = sphi 0, %s143
      %s161 = sphi 0, %s161
      %s163 = sphi 0, %s161
      %s164 = sphi 0, %s163
      %s178 = sphi 0, %s164
      %s182 = sphi 0, %s182
      %s184 = sphi 0, %s182
      %s185 = sphi 0, %s184
      %s199 = sphi 0, %s185
      %s203 = sphi 0, %s203
      %s205 = sphi 0, %s203
      %s206 = sphi 0, %s205
      %s220 = sphi 0, %s206
      %s224 = sphi 0, %s224
      %s226 = sphi 0, %s224
      %s227 = sphi 0, %s226
      %s241 = sphi 0, %s227
      %s245 = sphi 0, %s245
      %s247 = sphi 0, %s245
      %s248 = sphi 0, %s247
      %s262 = sphi 0, %s248
      %s266 = sphi 0, %s266
      %s268 = sphi 0, %s266
      %s269 = sphi 0, %s268
      %s283 = sphi 0, %s269
      %s287 = sphi 0, %s287
      %s289 = sphi 0, %s287
      %s290 = sphi 0, %s289
      %s304 = sphi 0, %s290
      %s310 = sphi 0, %s312
      %s313 = sphi 0, %s310
      %s314 = sphi 0, %s313
      %s330 = sphi 0, %s314
    $region4: #{tpu_custom_call.1} parent=1 // loop_header_branch
      %25 = sbr.rel (%p23) target = $region8
    $region5: #{tpu_custom_call.1} parent=1 // loop_body
      %s27 = ssub.s32 %s22, 1
      %s28 = ssub.s32 %s22, 2
      %s29 = sadd.s32 %s22, 1
      %s30 = ssub.s32 %s22, %s29
      %p31 = scmp.eq.s32.totalorder %s30, 0
      %s33 = sadd.s32 %s32, 1
      %s34 = scalar_select %p31, %s32, %s33
      %p37 = pneg %p31
      %p38 = scmp.eq.s32.totalorder %s22, 1
      %p39 = por %p37, %p38
      %p40 = scmp.ne.s32.totalorder %s32, %s35
      %p41 = scmp.eq.s32.totalorder %s22, 0
      %p42 = por %p40, %p41
      %p43 = scmp.ne.s32.totalorder %s32, %s35
      %p44 = scmp.eq.s32.totalorder %s27, 1
      %p45 = por %p43, %p44
      %p46 = scmp.ne.s32.totalorder %s35, %s36
      %p47 = scmp.eq.s32.totalorder %s27, 0
      %p48 = por %p46, %p47
      %p49 = scmp.ne.s32.totalorder %s35, %s36
      %p50 = scmp.eq.s32.totalorder %s28, 1
      %p51 = por %p49, %p50
      %p53 = scmp.ne.s32.totalorder %s36, %s52
      %p54 = scmp.eq.s32.totalorder %s28, 0
      %p55 = por %p53, %p54
      %s57 = sadd.s32 %s56, 1
      %p60 = scmp.eq.s32.totalorder %s22, 1
      %p61 = scmp.ne.s32.totalorder %s56, %s58
      %p62 = scmp.eq.s32.totalorder %s22, 0
      %p63 = por %p61, %p62
      %p64 = scmp.ne.s32.totalorder %s56, %s58
      %p65 = scmp.eq.s32.totalorder %s27, 1
      %p66 = por %p64, %p65
      %p67 = scmp.ne.s32.totalorder %s58, %s59
      %p68 = scmp.eq.s32.totalorder %s27, 0
      %p69 = por %p67, %p68
      %p70 = scmp.ne.s32.totalorder %s58, %s59
      %p71 = scmp.eq.s32.totalorder %s28, 1
      %p72 = por %p70, %p71
      %p74 = scmp.ne.s32.totalorder %s59, %s73
      %p75 = scmp.eq.s32.totalorder %s28, 0
      %p76 = por %p74, %p75
      %s78 = sadd.s32 %s77, 1
      %p81 = scmp.eq.s32.totalorder %s22, 1
      %p82 = scmp.ne.s32.totalorder %s77, %s79
      %p83 = scmp.eq.s32.totalorder %s22, 0
      %p84 = por %p82, %p83
      %p85 = scmp.ne.s32.totalorder %s77, %s79
      %p86 = scmp.eq.s32.totalorder %s27, 1
      %p87 = por %p85, %p86
      %p88 = scmp.ne.s32.totalorder %s79, %s80
      %p89 = scmp.eq.s32.totalorder %s27, 0
      %p90 = por %p88, %p89
      %p91 = scmp.ne.s32.totalorder %s79, %s80
      %p92 = scmp.eq.s32.totalorder %s28, 1
      %p93 = por %p91, %p92
      %p95 = scmp.ne.s32.totalorder %s80, %s94
      %p96 = scmp.eq.s32.totalorder %s28, 0
      %p97 = por %p95, %p96
      %s99 = sadd.s32 %s98, 1
      %p102 = scmp.eq.s32.totalorder %s22, 1
      %p103 = scmp.ne.s32.totalorder %s98, %s100
      %p104 = scmp.eq.s32.totalorder %s22, 0
      %p105 = por %p103, %p104
      %p106 = scmp.ne.s32.totalorder %s98, %s100
      %p107 = scmp.eq.s32.totalorder %s27, 1
      %p108 = por %p106, %p107
      %p109 = scmp.ne.s32.totalorder %s100, %s101
      %p110 = scmp.eq.s32.totalorder %s27, 0
      %p111 = por %p109, %p110
      %p112 = scmp.ne.s32.totalorder %s100, %s101
      %p113 = scmp.eq.s32.totalorder %s28, 1
      %p114 = por %p112, %p113
      %p116 = scmp.ne.s32.totalorder %s101, %s115
      %p117 = scmp.eq.s32.totalorder %s28, 0
      %p118 = por %p116, %p117
      %s120 = sadd.s32 %s119, 1
      %p123 = scmp.eq.s32.totalorder %s22, 1
      %p124 = scmp.ne.s32.totalorder %s119, %s121
      %p125 = scmp.eq.s32.totalorder %s22, 0
      %p126 = por %p124, %p125
      %p127 = scmp.ne.s32.totalorder %s119, %s121
      %p128 = scmp.eq.s32.totalorder %s27, 1
      %p129 = por %p127, %p128
      %p130 = scmp.ne.s32.totalorder %s121, %s122
      %p131 = scmp.eq.s32.totalorder %s27, 0
      %p132 = por %p130, %p131
      %p133 = scmp.ne.s32.totalorder %s121, %s122
      %p134 = scmp.eq.s32.totalorder %s28, 1
      %p135 = por %p133, %p134
      %p137 = scmp.ne.s32.totalorder %s122, %s136
      %p138 = scmp.eq.s32.totalorder %s28, 0
      %p139 = por %p137, %p138
      %s141 = sadd.s32 %s140, 1
      %p144 = scmp.eq.s32.totalorder %s22, 1
      %p145 = scmp.ne.s32.totalorder %s140, %s142
      %p146 = scmp.eq.s32.totalorder %s22, 0
      %p147 = por %p145, %p146
      %p148 = scmp.ne.s32.totalorder %s140, %s142
      %p149 = scmp.eq.s32.totalorder %s27, 1
      %p150 = por %p148, %p149
      %p151 = scmp.ne.s32.totalorder %s142, %s143
      %p152 = scmp.eq.s32.totalorder %s27, 0
      %p153 = por %p151, %p152
      %p154 = scmp.ne.s32.totalorder %s142, %s143
      %p155 = scmp.eq.s32.totalorder %s28, 1
      %p156 = por %p154, %p155
      %p158 = scmp.ne.s32.totalorder %s143, %s157
      %p159 = scmp.eq.s32.totalorder %s28, 0
      %p160 = por %p158, %p159
      %s162 = sadd.s32 %s161, 1
      %p165 = scmp.eq.s32.totalorder %s22, 1
      %p166 = scmp.ne.s32.totalorder %s161, %s163
      %p167 = scmp.eq.s32.totalorder %s22, 0
      %p168 = por %p166, %p167
      %p169 = scmp.ne.s32.totalorder %s161, %s163
      %p170 = scmp.eq.s32.totalorder %s27, 1
      %p171 = por %p169, %p170
      %p172 = scmp.ne.s32.totalorder %s163, %s164
      %p173 = scmp.eq.s32.totalorder %s27, 0
      %p174 = por %p172, %p173
      %p175 = scmp.ne.s32.totalorder %s163, %s164
      %p176 = scmp.eq.s32.totalorder %s28, 1
      %p177 = por %p175, %p176
      %p179 = scmp.ne.s32.totalorder %s164, %s178
      %p180 = scmp.eq.s32.totalorder %s28, 0
      %p181 = por %p179, %p180
      %s183 = sadd.s32 %s182, 1
      %p186 = scmp.eq.s32.totalorder %s22, 1
      %p187 = scmp.ne.s32.totalorder %s182, %s184
      %p188 = scmp.eq.s32.totalorder %s22, 0
      %p189 = por %p187, %p188
      %p190 = scmp.ne.s32.totalorder %s182, %s184
      %p191 = scmp.eq.s32.totalorder %s27, 1
      %p192 = por %p190, %p191
      %p193 = scmp.ne.s32.totalorder %s184, %s185
      %p194 = scmp.eq.s32.totalorder %s27, 0
      %p195 = por %p193, %p194
      %p196 = scmp.ne.s32.totalorder %s184, %s185
      %p197 = scmp.eq.s32.totalorder %s28, 1
      %p198 = por %p196, %p197
      %p200 = scmp.ne.s32.totalorder %s185, %s199
      %p201 = scmp.eq.s32.totalorder %s28, 0
      %p202 = por %p200, %p201
      %s204 = sadd.s32 %s203, 1
      %p207 = scmp.eq.s32.totalorder %s22, 1
      %p208 = scmp.ne.s32.totalorder %s203, %s205
      %p209 = scmp.eq.s32.totalorder %s22, 0
      %p210 = por %p208, %p209
      %p211 = scmp.ne.s32.totalorder %s203, %s205
      %p212 = scmp.eq.s32.totalorder %s27, 1
      %p213 = por %p211, %p212
      %p214 = scmp.ne.s32.totalorder %s205, %s206
      %p215 = scmp.eq.s32.totalorder %s27, 0
      %p216 = por %p214, %p215
      %p217 = scmp.ne.s32.totalorder %s205, %s206
      %p218 = scmp.eq.s32.totalorder %s28, 1
      %p219 = por %p217, %p218
      %p221 = scmp.ne.s32.totalorder %s206, %s220
      %p222 = scmp.eq.s32.totalorder %s28, 0
      %p223 = por %p221, %p222
      %s225 = sadd.s32 %s224, 1
      %p228 = scmp.eq.s32.totalorder %s22, 1
      %p229 = scmp.ne.s32.totalorder %s224, %s226
      %p230 = scmp.eq.s32.totalorder %s22, 0
      %p231 = por %p229, %p230
      %p232 = scmp.ne.s32.totalorder %s224, %s226
      %p233 = scmp.eq.s32.totalorder %s27, 1
      %p234 = por %p232, %p233
      %p235 = scmp.ne.s32.totalorder %s226, %s227
      %p236 = scmp.eq.s32.totalorder %s27, 0
      %p237 = por %p235, %p236
      %p238 = scmp.ne.s32.totalorder %s226, %s227
      %p239 = scmp.eq.s32.totalorder %s28, 1
      %p240 = por %p238, %p239
      %p242 = scmp.ne.s32.totalorder %s227, %s241
      %p243 = scmp.eq.s32.totalorder %s28, 0
      %p244 = por %p242, %p243
      %s246 = sadd.s32 %s245, 1
      %p249 = scmp.eq.s32.totalorder %s22, 1
      %p250 = scmp.ne.s32.totalorder %s245, %s247
      %p251 = scmp.eq.s32.totalorder %s22, 0
      %p252 = por %p250, %p251
      %p253 = scmp.ne.s32.totalorder %s245, %s247
      %p254 = scmp.eq.s32.totalorder %s27, 1
      %p255 = por %p253, %p254
      %p256 = scmp.ne.s32.totalorder %s247, %s248
      %p257 = scmp.eq.s32.totalorder %s27, 0
      %p258 = por %p256, %p257
      %p259 = scmp.ne.s32.totalorder %s247, %s248
      %p260 = scmp.eq.s32.totalorder %s28, 1
      %p261 = por %p259, %p260
      %p263 = scmp.ne.s32.totalorder %s248, %s262
      %p264 = scmp.eq.s32.totalorder %s28, 0
      %p265 = por %p263, %p264
      %s267 = sadd.s32 %s266, 1
      %p270 = scmp.eq.s32.totalorder %s22, 1
      %p271 = scmp.ne.s32.totalorder %s266, %s268
      %p272 = scmp.eq.s32.totalorder %s22, 0
      %p273 = por %p271, %p272
      %p274 = scmp.ne.s32.totalorder %s266, %s268
      %p275 = scmp.eq.s32.totalorder %s27, 1
      %p276 = por %p274, %p275
      %p277 = scmp.ne.s32.totalorder %s268, %s269
      %p278 = scmp.eq.s32.totalorder %s27, 0
      %p279 = por %p277, %p278
      %p280 = scmp.ne.s32.totalorder %s268, %s269
      %p281 = scmp.eq.s32.totalorder %s28, 1
      %p282 = por %p280, %p281
      %p284 = scmp.ne.s32.totalorder %s269, %s283
      %p285 = scmp.eq.s32.totalorder %s28, 0
      %p286 = por %p284, %p285
      %s288 = sadd.s32 %s287, 1
      %p291 = scmp.eq.s32.totalorder %s22, 1
      %p292 = scmp.ne.s32.totalorder %s287, %s289
      %p293 = scmp.eq.s32.totalorder %s22, 0
      %p294 = por %p292, %p293
      %p295 = scmp.ne.s32.totalorder %s287, %s289
      %p296 = scmp.eq.s32.totalorder %s27, 1
      %p297 = por %p295, %p296
      %p298 = scmp.ne.s32.totalorder %s289, %s290
      %p299 = scmp.eq.s32.totalorder %s27, 0
      %p300 = por %p298, %p299
      %p301 = scmp.ne.s32.totalorder %s289, %s290
      %p302 = scmp.eq.s32.totalorder %s28, 1
      %p303 = por %p301, %p302
      %p305 = scmp.ne.s32.totalorder %s290, %s304
      %p306 = scmp.eq.s32.totalorder %s28, 0
      %p307 = por %p305, %p306
      %s308 = ssub.s32 %s22, %s29
      %p309 = scmp.eq.s32.totalorder %s308, 0
      %s311 = sadd.s32 %s310, 1
      %s312 = scalar_select %p309, %s310, %s311
      %p315 = pneg %p309
      %p316 = scmp.eq.s32.totalorder %s22, 1
      %p317 = por %p315, %p316
      %p318 = scmp.ne.s32.totalorder %s310, %s313
      %p319 = scmp.eq.s32.totalorder %s22, 0
      %p320 = por %p318, %p319
      %p321 = scmp.ne.s32.totalorder %s310, %s313
      %p322 = scmp.eq.s32.totalorder %s27, 1
      %p323 = por %p321, %p322
      %p324 = scmp.ne.s32.totalorder %s313, %s314
      %p325 = scmp.eq.s32.totalorder %s27, 0
      %p326 = por %p324, %p325
      %p327 = scmp.ne.s32.totalorder %s313, %s314
      %p328 = scmp.eq.s32.totalorder %s28, 1
      %p329 = por %p327, %p328
      %p331 = scmp.ne.s32.totalorder %s314, %s330
      %p332 = scmp.eq.s32.totalorder %s28, 0
      %p333 = por %p331, %p332
      %p334 = scmp.le.s32.totalorder 1, %s22
      %p335 = scmp.lt.s32.totalorder %s22, 3
      %p336 = pnand %p334, %p335
      %p337 = pneg %p336
      // Predicated region
      $region9: #{tpu_custom_call.1} parent=5 // pred_check
        _
      $region10: #{tpu_custom_call.1} parent=5 // pred_check_branch
        %339 = sbr.rel (%p336) target = $region12
      $region11: #{tpu_custom_call.1} parent=5 // pred_region
        %s340 = ssub.s32 %s22, 1
        // Predicated region
        $region13: #{tpu_custom_call.1} parent=11 // pred_check
          %p341 = pneg %p69
        $region14: #{tpu_custom_call.1} parent=11 // pred_check_branch
          %343 = sbr.rel (%p341) target = $region16
        $region15: #{tpu_custom_call.1} parent=11 // pred_region
          _
        $region16: #{tpu_custom_call.1} parent=11 // pred_fallthru
          _
        // Predicated region
        $region17: #{tpu_custom_call.1} parent=11 // pred_check
          %p344 = pneg %p90
        $region18: #{tpu_custom_call.1} parent=11 // pred_check_branch
          %346 = sbr.rel (%p344) target = $region20
        $region19: #{tpu_custom_call.1} parent=11 // pred_region
          _
        $region20: #{tpu_custom_call.1} parent=11 // pred_fallthru
          _
        // Predicated region
        $region21: #{tpu_custom_call.1} parent=11 // pred_check
          %p347 = pneg %p111
        $region22: #{tpu_custom_call.1} parent=11 // pred_check_branch
          %349 = sbr.rel (%p347) target = $region24
        $region23: #{tpu_custom_call.1} parent=11 // pred_region
          _
        $region24: #{tpu_custom_call.1} parent=11 // pred_fallthru
          _
        // Predicated region
        $region25: #{tpu_custom_call.1} parent=11 // pred_check
          %p350 = pneg %p132
        $region26: #{tpu_custom_call.1} parent=11 // pred_check_branch
          %352 = sbr.rel (%p350) target = $region28
        $region27: #{tpu_custom_call.1} parent=11 // pred_region
          _
        $region28: #{tpu_custom_call.1} parent=11 // pred_fallthru
          _
        // Predicated region
        $region29: #{tpu_custom_call.1} parent=11 // pred_check
          %p353 = pneg %p153
        $region30: #{tpu_custom_call.1} parent=11 // pred_check_branch
          %355 = sbr.rel (%p353) target = $region32
        $region31: #{tpu_custom_call.1} parent=11 // pred_region
          _
        $region32: #{tpu_custom_call.1} parent=11 // pred_fallthru
          _
        // Predicated region
        $region33: #{tpu_custom_call.1} parent=11 // pred_check
          %p356 = pneg %p174
        $region34: #{tpu_custom_call.1} parent=11 // pred_check_branch
          %358 = sbr.rel (%p356) target = $region36
        $region35: #{tpu_custom_call.1} parent=11 // pred_region
          _
        $region36: #{tpu_custom_call.1} parent=11 // pred_fallthru
          _
        // Predicated region
        $region37: #{tpu_custom_call.1} parent=11 // pred_check
          %p359 = pneg %p195
        $region38: #{tpu_custom_call.1} parent=11 // pred_check_branch
          %361 = sbr.rel (%p359) target = $region40
        $region39: #{tpu_custom_call.1} parent=11 // pred_region
          _
        $region40: #{tpu_custom_call.1} parent=11 // pred_fallthru
          _
        // Predicated region
        $region41: #{tpu_custom_call.1} parent=11 // pred_check
          %p362 = pneg %p216
        $region42: #{tpu_custom_call.1} parent=11 // pred_check_branch
          %364 = sbr.rel (%p362) target = $region44
        $region43: #{tpu_custom_call.1} parent=11 // pred_region
          _
        $region44: #{tpu_custom_call.1} parent=11 // pred_fallthru
          _
        // Predicated region
        $region45: #{tpu_custom_call.1} parent=11 // pred_check
          %p365 = pneg %p237
        $region46: #{tpu_custom_call.1} parent=11 // pred_check_branch
          %367 = sbr.rel (%p365) target = $region48
        $region47: #{tpu_custom_call.1} parent=11 // pred_region
          _
        $region48: #{tpu_custom_call.1} parent=11 // pred_fallthru
          _
        // Predicated region
        $region49: #{tpu_custom_call.1} parent=11 // pred_check
          %p368 = pneg %p258
        $region50: #{tpu_custom_call.1} parent=11 // pred_check_branch
          %370 = sbr.rel (%p368) target = $region52
        $region51: #{tpu_custom_call.1} parent=11 // pred_region
          _
        $region52: #{tpu_custom_call.1} parent=11 // pred_fallthru
          _
        // Predicated region
        $region53: #{tpu_custom_call.1} parent=11 // pred_check
          %p371 = pneg %p279
        $region54: #{tpu_custom_call.1} parent=11 // pred_check_branch
          %373 = sbr.rel (%p371) target = $region56
        $region55: #{tpu_custom_call.1} parent=11 // pred_region
          _
        $region56: #{tpu_custom_call.1} parent=11 // pred_fallthru
          _
        // Predicated region
        $region57: #{tpu_custom_call.1} parent=11 // pred_check
          %p374 = pneg %p300
        $region58: #{tpu_custom_call.1} parent=11 // pred_check_branch
          %376 = sbr.rel (%p374) target = $region60
        $region59: #{tpu_custom_call.1} parent=11 // pred_region
          _
        $region60: #{tpu_custom_call.1} parent=11 // pred_fallthru
          _
      $region12: #{tpu_custom_call.1} parent=5 // pred_fallthru
        _
      %p377 = scmp.lt.s32.totalorder %s22, 2
      // Predicated region
      $region61: #{tpu_custom_call.1} parent=5 // pred_check
        %p378 = pneg %p377
      $region62: #{tpu_custom_call.1} parent=5 // pred_check_branch
        %380 = sbr.rel (%p378) target = $region64
      $region63: #{tpu_custom_call.1} parent=5 // pred_region
        // Predicated region
        $region65: #{tpu_custom_call.1} parent=63 // pred_check
          %p381 = pneg %p42
        $region66: #{tpu_custom_call.1} parent=63 // pred_check_branch
          %383 = sbr.rel (%p381) target = $region68
        $region67: #{tpu_custom_call.1} parent=63 // pred_region
          %p384 = scmp.lt.s32.totalorder %s22, 1
          %s385 = scalar_select %p384, %s22, 1
          %s386 = smul.addr %s385, 8
          %s387 = scalar_lea.vmem %s0, %s386
        $region68: #{tpu_custom_call.1} parent=63 // pred_fallthru
          _
      $region64: #{tpu_custom_call.1} parent=5 // pred_fallthru
        _
      %p388 = scmp.le.s32.totalorder 1, %s22
      %p389 = scmp.lt.s32.totalorder %s22, 3
      %p390 = pnand %p388, %p389
      %p391 = pneg %p390
      // Predicated region
      $region69: #{tpu_custom_call.1} parent=5 // pred_check
        _
      $region70: #{tpu_custom_call.1} parent=5 // pred_check_branch
        %393 = sbr.rel (%p390) target = $region72
      $region71: #{tpu_custom_call.1} parent=5 // pred_region
        %s394 = ssub.s32 %s22, 1
        %p395 = scmp.lt.s32.totalorder %s27, 1
        %s396 = scalar_select %p395, %s27, 1
        %s397 = smul.addr %s396, 8
        %s398 = scalar_lea.vmem %s0, %s397
        %p399 = pneg %p48
        %p400 = pneg %p45
        %p401 = pneg %p69
        %p402 = pneg %p66
        %p403 = pneg %p90
        %p404 = pneg %p87
        %p405 = pneg %p111
        %p406 = pneg %p108
        %p407 = pneg %p132
        %p408 = pneg %p129
        %p409 = pneg %p153
        %p410 = pneg %p150
        %p411 = pneg %p174
        %p412 = pneg %p171
        %p413 = pneg %p195
        %p414 = pneg %p192
        %p415 = pneg %p216
        %p416 = pneg %p213
        %p417 = pneg %p237
        %p418 = pneg %p234
        %p419 = pneg %p258
        %p420 = pneg %p255
        %p421 = pneg %p279
        %p422 = pneg %p276
        %p423 = pneg %p300
        %p424 = pneg %p297
        %p425 = pneg %p326
        %p426 = pneg %p323
        %s427 = sand.u32 %s313, 1
        %s428 = scalar_lea.sflag [#allocation3], %s427
        %s429 = sand.u32 %s313, 1
        %s430 = smul.addr %s429, 8
        %s431 = scalar_lea.vmem [#allocation2], %s430
        %p432 = scmp.lt.s32.totalorder %s27, 1
        %s433 = scalar_select %p432, %s27, 1
        %s434 = smul.addr %s433, 8
        %s435 = scalar_lea.vmem %s0, %s434
        %v437 = vld [vmem:[%s435] sm:$0xff]
        %v438 = vld [vmem:[%s1] sm:$0x1]
        %v439 = vld [vmem:[%s2] sm:$0x1]
        %vm440 = vcmask 261120
        %v441 = vsel %vm440, %v437, 0.0
        %442 = vadd.xlane.f32.xlu0 %v441
        %v443 = vpop.xlane.xlu0 %442
        %v444 = vrcp.pop 32.0
        %v445 = vmul.f32 32.0, %v444
        %v446 = vsub.f32 1.0, %v445
        %v447 = vmul.f32 %v444, %v446
        %v448 = vadd.f32 %v444, %v447
        %vm449 = vweird.f32 %v444
        %v450 = vsel %vm449, %v444, %v448
        %v451 = vmul.f32 %v443, %v450
        %v452 = vsub.f32 %v437, %v451
        %v453 = vmul.f32 %v452, %v452
        %v454 = vsel %vm440, %v453, 0.0
        %455 = vadd.xlane.f32.xlu0 %v454
        %v456 = vpop.xlane.xlu0 %455
        %v457 = vmul.f32 %v456, %v450
        %v458 = vadd.f32 %v457, 1e-05
        %v459 = vrsqrt.pop %v458
        %v460 = vmul.f32 %v459, %v458
        %v461 = vmul.f32 %v460, %v459
        %v462 = vmul.f32 0.5, %v461
        %v463 = vsub.f32 1.5, %v462
        %v464 = vmul.f32 %v459, %v463
        %vm465 = vweird.f32 %v458
        %vm466 = vweird.f32 %v459
        %vm467 = vmor %vm465, %vm466
        %v468 = vsel %vm467, %v459, %v464
        %v469 = vmul.f32 %v452, %v468
        %v471 = vperm.slane %v438, 0
        %v473 = vmul.f32 %v471, %v469
        %v475 = vperm.slane %v439, 0
        %v477 = vadd.f32 %v473, %v475
        %v478 = vpack.c.bf16 %v477, %v477
        %v479 = vld [vmem:[%s5] sm:$0xf]
        %v480 = vld [vmem:[%s5 + $0x4] sm:$0xf]
        %v481 = vld [vmem:[%s5 + $0x8] sm:$0xf]
        %v482 = vld [vmem:[%s5 + $0xc] sm:$0xf]
        %v483 = vld [vmem:[%s5 + $0x10] sm:$0xf]
        %v484 = vld [vmem:[%s5 + $0x14] sm:$0xf]
        %v485 = vld [vmem:[%s5 + $0x18] sm:$0xf]
        %v486 = vld [vmem:[%s5 + $0x1c] sm:$0xf]
        %v487 = vld [vmem:[%s5 + $0x20] sm:$0xf]
        %v488 = vld [vmem:[%s5 + $0x24] sm:$0xf]
        %v489 = vld [vmem:[%s5 + $0x28] sm:$0xf]
        %v490 = vld [vmem:[%s5 + $0x2c] sm:$0xf]
        %v491 = vld [vmem:[%s5 + $0x30] sm:$0xf]
        %v492 = vld [vmem:[%s5 + $0x34] sm:$0xf]
        %v493 = vld [vmem:[%s5 + $0x38] sm:$0xf]
        %v494 = vld [vmem:[%s5 + $0x3c] sm:$0xf]
        %v499 = vunpack.c.l.b16 %v479
        %v500 = vunpack.c.l.b16 %v480
        %v501 = vunpack.c.l.b16 %v481
        %v502 = vunpack.c.l.b16 %v482
        %v503 = vpack.c.b16 %v500, %v499
        %v504 = vpack.c.b16 %v502, %v501
        %v508 = vsel %vm440, %v478, 0
        %510 = vmatpush.bf16.msra.mxu0 0
        %511 = vmatpush.bf16.msra.mxu0 0
        %512 = vmatpush.bf16.msra.mxu0 0
        %513 = vmatpush.bf16.msra.mxu0 0
        %514 = vmatpush.bf16.msra.mxu0 0
        %515 = vmatpush.bf16.msra.mxu0 0
        %516 = vmatpush.bf16.msra.mxu0 %v504
        %517 = vmatpush.bf16.msra.mxu0 %v503
        %518 = vmatmul.bf16.gmra.mxu0 %v508
        %v519 = vpop.f32.mrf.mxu0
        %v520 = vadd.f32 0.0, %v519
        %v521 = vpop.f32.mrf.mxu0
        %522 = vdwg.mxu0
        %v527 = vunpack.c.l.b16 %v483
        %v528 = vunpack.c.l.b16 %v484
        %v529 = vunpack.c.l.b16 %v485
        %v530 = vunpack.c.l.b16 %v486
        %v531 = vpack.c.b16 %v528, %v527
        %v532 = vpack.c.b16 %v530, %v529
        %535 = vmatpush.bf16.msra.mxu0 0
        %536 = vmatpush.bf16.msra.mxu0 0
        %537 = vmatpush.bf16.msra.mxu0 0
        %538 = vmatpush.bf16.msra.mxu0 0
        %539 = vmatpush.bf16.msra.mxu0 0
        %540 = vmatpush.bf16.msra.mxu0 0
        %541 = vmatpush.bf16.msra.mxu0 %v532
        %542 = vmatpush.bf16.msra.mxu0 %v531
        %543 = vmatmul.bf16.gmra.mxu0 %v508
        %v544 = vpop.f32.mrf.mxu0
        %v545 = vadd.f32 0.0, %v544
        %v546 = vpop.f32.mrf.mxu0
        %547 = vdwg.mxu0
        %v552 = vunpack.c.l.b16 %v487
        %v553 = vunpack.c.l.b16 %v488
        %v554 = vunpack.c.l.b16 %v489
        %v555 = vunpack.c.l.b16 %v490
        %v556 = vpack.c.b16 %v553, %v552
        %v557 = vpack.c.b16 %v555, %v554
        %560 = vmatpush.bf16.msra.mxu0 0
        %561 = vmatpush.bf16.msra.mxu0 0
        %562 = vmatpush.bf16.msra.mxu0 0
        %563 = vmatpush.bf16.msra.mxu0 0
        %564 = vmatpush.bf16.msra.mxu0 0
        %565 = vmatpush.bf16.msra.mxu0 0
        %566 = vmatpush.bf16.msra.mxu0 %v557
        %567 = vmatpush.bf16.msra.mxu0 %v556
        %568 = vmatmul.bf16.gmra.mxu0 %v508
        %v569 = vpop.f32.mrf.mxu0
        %v570 = vadd.f32 0.0, %v569
        %v571 = vpop.f32.mrf.mxu0
        %572 = vdwg.mxu0
        %v577 = vunpack.c.l.b16 %v491
        %v578 = vunpack.c.l.b16 %v492
        %v579 = vunpack.c.l.b16 %v493
        %v580 = vunpack.c.l.b16 %v494
        %v581 = vpack.c.b16 %v578, %v577
        %v582 = vpack.c.b16 %v580, %v579
        %585 = vmatpush.bf16.msra.mxu0 0
        %586 = vmatpush.bf16.msra.mxu0 0
        %587 = vmatpush.bf16.msra.mxu0 0
        %588 = vmatpush.bf16.msra.mxu0 0
        %589 = vmatpush.bf16.msra.mxu0 0
        %590 = vmatpush.bf16.msra.mxu0 0
        %591 = vmatpush.bf16.msra.mxu0 %v582
        %592 = vmatpush.bf16.msra.mxu0 %v581
        %593 = vmatmul.bf16.gmra.mxu0 %v508
        %v594 = vpop.f32.mrf.mxu0
        %v595 = vadd.f32 0.0, %v594
        %v596 = vpop.f32.mrf.mxu0
        %597 = vdwg.mxu0
        %v598 = vld [vmem:[%s6] sm:$0xf]
        %v599 = vld [vmem:[%s6 + $0x4] sm:$0xf]
        %v600 = vld [vmem:[%s6 + $0x8] sm:$0xf]
        %v601 = vld [vmem:[%s6 + $0xc] sm:$0xf]
        %v602 = vld [vmem:[%s6 + $0x10] sm:$0xf]
        %v603 = vld [vmem:[%s6 + $0x14] sm:$0xf]
        %v604 = vld [vmem:[%s6 + $0x18] sm:$0xf]
        %v605 = vld [vmem:[%s6 + $0x1c] sm:$0xf]
        %v606 = vld [vmem:[%s6 + $0x20] sm:$0xf]
        %v607 = vld [vmem:[%s6 + $0x24] sm:$0xf]
        %v608 = vld [vmem:[%s6 + $0x28] sm:$0xf]
        %v609 = vld [vmem:[%s6 + $0x2c] sm:$0xf]
        %v610 = vld [vmem:[%s6 + $0x30] sm:$0xf]
        %v611 = vld [vmem:[%s6 + $0x34] sm:$0xf]
        %v612 = vld [vmem:[%s6 + $0x38] sm:$0xf]
        %v613 = vld [vmem:[%s6 + $0x3c] sm:$0xf]
        %v618 = vunpack.c.l.b16 %v598
        %v619 = vunpack.c.l.b16 %v599
        %v620 = vunpack.c.l.b16 %v600
        %v621 = vunpack.c.l.b16 %v601
        %v622 = vpack.c.b16 %v619, %v618
        %v623 = vpack.c.b16 %v621, %v620
        %626 = vmatpush.bf16.msra.mxu0 0
        %627 = vmatpush.bf16.msra.mxu0 0
        %628 = vmatpush.bf16.msra.mxu0 0
        %629 = vmatpush.bf16.msra.mxu0 0
        %630 = vmatpush.bf16.msra.mxu0 0
        %631 = vmatpush.bf16.msra.mxu0 0
        %632 = vmatpush.bf16.msra.mxu0 %v623
        %633 = vmatpush.bf16.msra.mxu0 %v622
        %634 = vmatmul.bf16.gmra.mxu0 %v508
        %v635 = vpop.f32.mrf.mxu0
        %v636 = vadd.f32 0.0, %v635
        %v637 = vpop.f32.mrf.mxu0
        %638 = vdwg.mxu0
        %v643 = vunpack.c.l.b16 %v602
        %v644 = vunpack.c.l.b16 %v603
        %v645 = vunpack.c.l.b16 %v604
        %v646 = vunpack.c.l.b16 %v605
        %v647 = vpack.c.b16 %v644, %v643
        %v648 = vpack.c.b16 %v646, %v645
        %651 = vmatpush.bf16.msra.mxu0 0
        %652 = vmatpush.bf16.msra.mxu0 0
        %653 = vmatpush.bf16.msra.mxu0 0
        %654 = vmatpush.bf16.msra.mxu0 0
        %655 = vmatpush.bf16.msra.mxu0 0
        %656 = vmatpush.bf16.msra.mxu0 0
        %657 = vmatpush.bf16.msra.mxu0 %v648
        %658 = vmatpush.bf16.msra.mxu0 %v647
        %659 = vmatmul.bf16.gmra.mxu0 %v508
        %v660 = vpop.f32.mrf.mxu0
        %v661 = vadd.f32 0.0, %v660
        %v662 = vpop.f32.mrf.mxu0
        %663 = vdwg.mxu0
        %v668 = vunpack.c.l.b16 %v606
        %v669 = vunpack.c.l.b16 %v607
        %v670 = vunpack.c.l.b16 %v608
        %v671 = vunpack.c.l.b16 %v609
        %v672 = vpack.c.b16 %v669, %v668
        %v673 = vpack.c.b16 %v671, %v670
        %676 = vmatpush.bf16.msra.mxu0 0
        %677 = vmatpush.bf16.msra.mxu0 0
        %678 = vmatpush.bf16.msra.mxu0 0
        %679 = vmatpush.bf16.msra.mxu0 0
        %680 = vmatpush.bf16.msra.mxu0 0
        %681 = vmatpush.bf16.msra.mxu0 0
        %682 = vmatpush.bf16.msra.mxu0 %v673
        %683 = vmatpush.bf16.msra.mxu0 %v672
        %684 = vmatmul.bf16.gmra.mxu0 %v508
        %v685 = vpop.f32.mrf.mxu0
        %v686 = vadd.f32 0.0, %v685
        %v687 = vpop.f32.mrf.mxu0
        %688 = vdwg.mxu0
        %v693 = vunpack.c.l.b16 %v610
        %v694 = vunpack.c.l.b16 %v611
        %v695 = vunpack.c.l.b16 %v612
        %v696 = vunpack.c.l.b16 %v613
        %v697 = vpack.c.b16 %v694, %v693
        %v698 = vpack.c.b16 %v696, %v695
        %701 = vmatpush.bf16.msra.mxu0 0
        %702 = vmatpush.bf16.msra.mxu0 0
        %703 = vmatpush.bf16.msra.mxu0 0
        %704 = vmatpush.bf16.msra.mxu0 0
        %705 = vmatpush.bf16.msra.mxu0 0
        %706 = vmatpush.bf16.msra.mxu0 0
        %707 = vmatpush.bf16.msra.mxu0 %v698
        %708 = vmatpush.bf16.msra.mxu0 %v697
        %709 = vmatmul.bf16.gmra.mxu0 %v508
        %v710 = vpop.f32.mrf.mxu0
        %v711 = vadd.f32 0.0, %v710
        %v712 = vpop.f32.mrf.mxu0
        %713 = vdwg.mxu0
        %v714 = vld [vmem:[%s7] sm:$0xf]
        %v715 = vld [vmem:[%s7 + $0x4] sm:$0xf]
        %v716 = vld [vmem:[%s7 + $0x8] sm:$0xf]
        %v717 = vld [vmem:[%s7 + $0xc] sm:$0xf]
        %v718 = vld [vmem:[%s7 + $0x10] sm:$0xf]
        %v719 = vld [vmem:[%s7 + $0x14] sm:$0xf]
        %v720 = vld [vmem:[%s7 + $0x18] sm:$0xf]
        %v721 = vld [vmem:[%s7 + $0x1c] sm:$0xf]
        %v722 = vld [vmem:[%s7 + $0x20] sm:$0xf]
        %v723 = vld [vmem:[%s7 + $0x24] sm:$0xf]
        %v724 = vld [vmem:[%s7 + $0x28] sm:$0xf]
        %v725 = vld [vmem:[%s7 + $0x2c] sm:$0xf]
        %v726 = vld [vmem:[%s7 + $0x30] sm:$0xf]
        %v727 = vld [vmem:[%s7 + $0x34] sm:$0xf]
        %v728 = vld [vmem:[%s7 + $0x38] sm:$0xf]
        %v729 = vld [vmem:[%s7 + $0x3c] sm:$0xf]
        %v734 = vunpack.c.l.b16 %v714
        %v735 = vunpack.c.l.b16 %v715
        %v736 = vunpack.c.l.b16 %v716
        %v737 = vunpack.c.l.b16 %v717
        %v738 = vpack.c.b16 %v735, %v734
        %v739 = vpack.c.b16 %v737, %v736
        %742 = vmatpush.bf16.msra.mxu0 0
        %743 = vmatpush.bf16.msra.mxu0 0
        %744 = vmatpush.bf16.msra.mxu0 0
        %745 = vmatpush.bf16.msra.mxu0 0
        %746 = vmatpush.bf16.msra.mxu0 0
        %747 = vmatpush.bf16.msra.mxu0 0
        %748 = vmatpush.bf16.msra.mxu0 %v739
        %749 = vmatpush.bf16.msra.mxu0 %v738
        %750 = vmatmul.bf16.gmra.mxu0 %v508
        %v751 = vpop.f32.mrf.mxu0
        %v752 = vadd.f32 0.0, %v751
        %v753 = vpop.f32.mrf.mxu0
        %754 = vdwg.mxu0
        %v759 = vunpack.c.l.b16 %v718
        %v760 = vunpack.c.l.b16 %v719
        %v761 = vunpack.c.l.b16 %v720
        %v762 = vunpack.c.l.b16 %v721
        %v763 = vpack.c.b16 %v760, %v759
        %v764 = vpack.c.b16 %v762, %v761
        %767 = vmatpush.bf16.msra.mxu0 0
        %768 = vmatpush.bf16.msra.mxu0 0
        %769 = vmatpush.bf16.msra.mxu0 0
        %770 = vmatpush.bf16.msra.mxu0 0
        %771 = vmatpush.bf16.msra.mxu0 0
        %772 = vmatpush.bf16.msra.mxu0 0
        %773 = vmatpush.bf16.msra.mxu0 %v764
        %774 = vmatpush.bf16.msra.mxu0 %v763
        %775 = vmatmul.bf16.gmra.mxu0 %v508
        %v776 = vpop.f32.mrf.mxu0
        %v777 = vadd.f32 0.0, %v776
        %v778 = vpop.f32.mrf.mxu0
        %779 = vdwg.mxu0
        %v784 = vunpack.c.l.b16 %v722
        %v785 = vunpack.c.l.b16 %v723
        %v786 = vunpack.c.l.b16 %v724
        %v787 = vunpack.c.l.b16 %v725
        %v788 = vpack.c.b16 %v785, %v784
        %v789 = vpack.c.b16 %v787, %v786
        %792 = vmatpush.bf16.msra.mxu0 0
        %793 = vmatpush.bf16.msra.mxu0 0
        %794 = vmatpush.bf16.msra.mxu0 0
        %795 = vmatpush.bf16.msra.mxu0 0
        %796 = vmatpush.bf16.msra.mxu0 0
        %797 = vmatpush.bf16.msra.mxu0 0
        %798 = vmatpush.bf16.msra.mxu0 %v789
        %799 = vmatpush.bf16.msra.mxu0 %v788
        %800 = vmatmul.bf16.gmra.mxu0 %v508
        %v801 = vpop.f32.mrf.mxu0
        %v802 = vadd.f32 0.0, %v801
        %v803 = vpop.f32.mrf.mxu0
        %804 = vdwg.mxu0
        %v809 = vunpack.c.l.b16 %v726
        %v810 = vunpack.c.l.b16 %v727
        %v811 = vunpack.c.l.b16 %v728
        %v812 = vunpack.c.l.b16 %v729
        %v813 = vpack.c.b16 %v810, %v809
        %v814 = vpack.c.b16 %v812, %v811
        %817 = vmatpush.bf16.msra.mxu0 0
        %818 = vmatpush.bf16.msra.mxu0 0
        %819 = vmatpush.bf16.msra.mxu0 0
        %820 = vmatpush.bf16.msra.mxu0 0
        %821 = vmatpush.bf16.msra.mxu0 0
        %822 = vmatpush.bf16.msra.mxu0 0
        %823 = vmatpush.bf16.msra.mxu0 %v814
        %824 = vmatpush.bf16.msra.mxu0 %v813
        %825 = vmatmul.bf16.gmra.mxu0 %v508
        %v826 = vpop.f32.mrf.mxu0
        %v827 = vadd.f32 0.0, %v826
        %v828 = vpop.f32.mrf.mxu0
        %829 = vdwg.mxu0
        %v830 = vlaneseq
        %v831 = vshrl.u32 %v830, 7
        %v832 = vlaneseq
        %v833 = vand.u32 %v832, 127
        %vm834 = vcmp.gt.s32.totalorder %v833, %v831
        %v835 = vsel %vm834, -1e+30, 0.0
        %v836 = vpack.c.bf16 %v520, %v520
        %v837 = vpack.c.bf16 %v545, %v545
        %v838 = vpack.c.bf16 %v570, %v570
        %v839 = vpack.c.bf16 %v595, %v595
        %v840 = vpack.c.bf16 %v636, %v636
        %v841 = vpack.c.bf16 %v661, %v661
        %v842 = vpack.c.bf16 %v686, %v686
        %v843 = vpack.c.bf16 %v711, %v711
        %vm844 = vcmask 64512
        %v846 = vsel %vm844, %v836, 0
        %v849 = vsel %vm844, %v840, 0
        %851 = vmatpush.bf16.xpose.msra.mxu0 0
        %852 = vmatpush.bf16.xpose.msra.mxu0 0
        %853 = vmatpush.bf16.xpose.msra.mxu0 0
        %854 = vmatpush.bf16.xpose.msra.mxu0 0
        %855 = vmatpush.bf16.xpose.msra.mxu0 0
        %856 = vmatpush.bf16.xpose.msra.mxu0 0
        %857 = vmatpush.bf16.xpose.msra.mxu0 0
        %858 = vmatpush.bf16.xpose.msra.mxu0 %v849
        %859 = vmatmul.bf16.gmra.mxu0 %v846
        %v860 = vpop.f32.mrf.mxu0
        %v861 = vadd.f32 %v835, %v860
        %v862 = vpop.f32.mrf.mxu0
        %863 = vdwg.mxu0
        %v865 = vsel %vm844, %v837, 0
        %v868 = vsel %vm844, %v841, 0
        %870 = vmatpush.bf16.xpose.msra.mxu0 0
        %871 = vmatpush.bf16.xpose.msra.mxu0 0
        %872 = vmatpush.bf16.xpose.msra.mxu0 0
        %873 = vmatpush.bf16.xpose.msra.mxu0 0
        %874 = vmatpush.bf16.xpose.msra.mxu0 0
        %875 = vmatpush.bf16.xpose.msra.mxu0 0
        %876 = vmatpush.bf16.xpose.msra.mxu0 0
        %877 = vmatpush.bf16.xpose.msra.mxu0 %v868
        %878 = vmatmul.bf16.gmra.mxu0 %v865
        %v879 = vpop.f32.mrf.mxu0
        %v880 = vadd.f32 %v835, %v879
        %v881 = vpop.f32.mrf.mxu0
        %882 = vdwg.mxu0
        %v884 = vsel %vm844, %v838, 0
        %v887 = vsel %vm844, %v842, 0
        %889 = vmatpush.bf16.xpose.msra.mxu0 0
        %890 = vmatpush.bf16.xpose.msra.mxu0 0
        %891 = vmatpush.bf16.xpose.msra.mxu0 0
        %892 = vmatpush.bf16.xpose.msra.mxu0 0
        %893 = vmatpush.bf16.xpose.msra.mxu0 0
        %894 = vmatpush.bf16.xpose.msra.mxu0 0
        %895 = vmatpush.bf16.xpose.msra.mxu0 0
        %896 = vmatpush.bf16.xpose.msra.mxu0 %v887
        %897 = vmatmul.bf16.gmra.mxu0 %v884
        %v898 = vpop.f32.mrf.mxu0
        %v899 = vadd.f32 %v835, %v898
        %v900 = vpop.f32.mrf.mxu0
        %901 = vdwg.mxu0
        %v903 = vsel %vm844, %v839, 0
        %v906 = vsel %vm844, %v843, 0
        %908 = vmatpush.bf16.xpose.msra.mxu0 0
        %909 = vmatpush.bf16.xpose.msra.mxu0 0
        %910 = vmatpush.bf16.xpose.msra.mxu0 0
        %911 = vmatpush.bf16.xpose.msra.mxu0 0
        %912 = vmatpush.bf16.xpose.msra.mxu0 0
        %913 = vmatpush.bf16.xpose.msra.mxu0 0
        %914 = vmatpush.bf16.xpose.msra.mxu0 0
        %915 = vmatpush.bf16.xpose.msra.mxu0 %v906
        %916 = vmatmul.bf16.gmra.mxu0 %v903
        %v917 = vpop.f32.mrf.mxu0
        %v918 = vadd.f32 %v835, %v917
        %v919 = vpop.f32.mrf.mxu0
        %920 = vdwg.mxu0
        %v921 = vsel %vm844, %v861, -inf
        %922 = vmax.xlane.f32.xlu0 %v921
        %v923 = vpop.xlane.xlu0 %922
        %v924 = vsel %vm844, %v880, -inf
        %925 = vmax.xlane.f32.xlu0 %v924
        %v926 = vpop.xlane.xlu0 %925
        %v927 = vsel %vm844, %v899, -inf
        %928 = vmax.xlane.f32.xlu0 %v927
        %v929 = vpop.xlane.xlu0 %928
        %v930 = vsel %vm844, %v918, -inf
        %931 = vmax.xlane.f32.xlu0 %v930
        %v932 = vpop.xlane.xlu0 %931
        %v933 = vsub.f32 %v861, %v923
        %v934 = vsub.f32 %v880, %v926
        %v935 = vsub.f32 %v899, %v929
        %v936 = vsub.f32 %v918, %v932
        %v937 = vmul.f32 %v933, 1.442695
        %v938 = vpow.pop %v937
        %v939 = vmul.f32 %v934, 1.442695
        %v940 = vpow.pop %v939
        %v941 = vmul.f32 %v935, 1.442695
        %v942 = vpow.pop %v941
        %v943 = vmul.f32 %v936, 1.442695
        %v944 = vpow.pop %v943
        %v945 = vsel %vm844, %v938, 0.0
        %946 = vadd.xlane.f32.xlu0 %v945
        %v947 = vpop.xlane.xlu0 %946
        %v948 = vsel %vm844, %v940, 0.0
        %949 = vadd.xlane.f32.xlu0 %v948
        %v950 = vpop.xlane.xlu0 %949
        %v951 = vsel %vm844, %v942, 0.0
        %952 = vadd.xlane.f32.xlu0 %v951
        %v953 = vpop.xlane.xlu0 %952
        %v954 = vsel %vm844, %v944, 0.0
        %955 = vadd.xlane.f32.xlu0 %v954
        %v956 = vpop.xlane.xlu0 %955
        %v957 = vrcp.pop %v947
        %v958 = vrcp.pop %v950
        %v959 = vrcp.pop %v953
        %v960 = vrcp.pop %v956
        %v961 = vmul.f32 %v938, %v957
        %v962 = vmul.f32 %v940, %v958
        %v963 = vmul.f32 %v942, %v959
        %v964 = vmul.f32 %v944, %v960
        %v965 = vpack.c.bf16 %v961, %v961
        %v966 = vpack.c.bf16 %v962, %v962
        %v967 = vpack.c.bf16 %v963, %v963
        %v968 = vpack.c.bf16 %v964, %v964
        %v969 = vpack.c.bf16 %v752, %v752
        %v970 = vpack.c.bf16 %v777, %v777
        %v971 = vpack.c.bf16 %v802, %v802
        %v972 = vpack.c.bf16 %v827, %v827
        %v974 = vsel %vm844, %v965, 0
        %vm976 = vcmask 1043456
        %v978 = vsel %vm976, %v969, 0
        %980 = vmatpush.bf16.msra.mxu0 0
        %981 = vmatpush.bf16.msra.mxu0 0
        %982 = vmatpush.bf16.msra.mxu0 0
        %983 = vmatpush.bf16.msra.mxu0 0
        %984 = vmatpush.bf16.msra.mxu0 0
        %985 = vmatpush.bf16.msra.mxu0 0
        %986 = vmatpush.bf16.msra.mxu0 0
        %987 = vmatpush.bf16.msra.mxu0 %v978
        %988 = vmatmul.bf16.gmra.mxu0 %v974
        %v989 = vpop.f32.mrf.mxu0
        %v990 = vadd.f32 0.0, %v989
        %v991 = vpop.f32.mrf.mxu0
        %992 = vdwg.mxu0
        %v994 = vsel %vm844, %v966, 0
        %v997 = vsel %vm976, %v970, 0
        %999 = vmatpush.bf16.msra.mxu0 0
        %1000 = vmatpush.bf16.msra.mxu0 0
        %1001 = vmatpush.bf16.msra.mxu0 0
        %1002 = vmatpush.bf16.msra.mxu0 0
        %1003 = vmatpush.bf16.msra.mxu0 0
        %1004 = vmatpush.bf16.msra.mxu0 0
        %1005 = vmatpush.bf16.msra.mxu0 0
        %1006 = vmatpush.bf16.msra.mxu0 %v997
        %1007 = vmatmul.bf16.gmra.mxu0 %v994
        %v1008 = vpop.f32.mrf.mxu0
        %v1009 = vadd.f32 0.0, %v1008
        %v1010 = vpop.f32.mrf.mxu0
        %1011 = vdwg.mxu0
        %v1013 = vsel %vm844, %v967, 0
        %v1016 = vsel %vm976, %v971, 0
        %1018 = vmatpush.bf16.msra.mxu0 0
        %1019 = vmatpush.bf16.msra.mxu0 0
        %1020 = vmatpush.bf16.msra.mxu0 0
        %1021 = vmatpush.bf16.msra.mxu0 0
        %1022 = vmatpush.bf16.msra.mxu0 0
        %1023 = vmatpush.bf16.msra.mxu0 0
        %1024 = vmatpush.bf16.msra.mxu0 0
        %1025 = vmatpush.bf16.msra.mxu0 %v1016
        %1026 = vmatmul.bf16.gmra.mxu0 %v1013
        %v1027 = vpop.f32.mrf.mxu0
        %v1028 = vadd.f32 0.0, %v1027
        %v1029 = vpop.f32.mrf.mxu0
        %1030 = vdwg.mxu0
        %v1032 = vsel %vm844, %v968, 0
        %v1035 = vsel %vm976, %v972, 0
        %1037 = vmatpush.bf16.msra.mxu0 0
        %1038 = vmatpush.bf16.msra.mxu0 0
        %1039 = vmatpush.bf16.msra.mxu0 0
        %1040 = vmatpush.bf16.msra.mxu0 0
        %1041 = vmatpush.bf16.msra.mxu0 0
        %1042 = vmatpush.bf16.msra.mxu0 0
        %1043 = vmatpush.bf16.msra.mxu0 0
        %1044 = vmatpush.bf16.msra.mxu0 %v1035
        %1045 = vmatmul.bf16.gmra.mxu0 %v1032
        %v1046 = vpop.f32.mrf.mxu0
        %v1047 = vadd.f32 0.0, %v1046
        %v1048 = vpop.f32.mrf.mxu0
        %1049 = vdwg.mxu0
        %v1050 = vpack.c.bf16 %v990, %v990
        %v1051 = vpack.c.bf16 %v1009, %v1009
        %v1052 = vpack.c.bf16 %v1028, %v1028
        %v1053 = vpack.c.bf16 %v1047, %v1047
        %v1054 = vld [vmem:[%s8] sm:$0xf]
        %v1055 = vld [vmem:[%s8 + $0x4] sm:$0xf]
        %v1056 = vld [vmem:[%s8 + $0x8] sm:$0xf]
        %v1057 = vld [vmem:[%s8 + $0xc] sm:$0xf]
        %v1059 = vsel %vm844, %v1050, 0
        %v1062 = vsel %vm976, %v1054, 0
        %1064 = vmatpush.bf16.msra.mxu0 0
        %1065 = vmatpush.bf16.msra.mxu0 0
        %1066 = vmatpush.bf16.msra.mxu0 0
        %1067 = vmatpush.bf16.msra.mxu0 0
        %1068 = vmatpush.bf16.msra.mxu0 0
        %1069 = vmatpush.bf16.msra.mxu0 0
        %1070 = vmatpush.bf16.msra.mxu0 0
        %1071 = vmatpush.bf16.msra.mxu0 %v1062
        %1072 = vmatmul.bf16.gmra.mxu0 %v1059
        %v1073 = vpop.f32.mrf.mxu0
        %v1074 = vadd.f32 0.0, %v1073
        %v1075 = vpop.f32.mrf.mxu0
        %1076 = vdwg.mxu0
        %v1078 = vsel %vm844, %v1051, 0
        %v1081 = vsel %vm976, %v1055, 0
        %1083 = vmatpush.bf16.msra.mxu0 0
        %1084 = vmatpush.bf16.msra.mxu0 0
        %1085 = vmatpush.bf16.msra.mxu0 0
        %1086 = vmatpush.bf16.msra.mxu0 0
        %1087 = vmatpush.bf16.msra.mxu0 0
        %1088 = vmatpush.bf16.msra.mxu0 0
        %1089 = vmatpush.bf16.msra.mxu0 0
        %1090 = vmatpush.bf16.msra.mxu0 %v1081
        %1091 = vmatmul.bf16.gmra.mxu0 %v1078
        %v1092 = vpop.f32.mrf.mxu0
        %v1093 = vadd.f32 0.0, %v1092
        %v1094 = vpop.f32.mrf.mxu0
        %1095 = vdwg.mxu0
        %v1097 = vsel %vm844, %v1052, 0
        %v1100 = vsel %vm976, %v1056, 0
        %1102 = vmatpush.bf16.msra.mxu0 0
        %1103 = vmatpush.bf16.msra.mxu0 0
        %1104 = vmatpush.bf16.msra.mxu0 0
        %1105 = vmatpush.bf16.msra.mxu0 0
        %1106 = vmatpush.bf16.msra.mxu0 0
        %1107 = vmatpush.bf16.msra.mxu0 0
        %1108 = vmatpush.bf16.msra.mxu0 0
        %1109 = vmatpush.bf16.msra.mxu0 %v1100
        %1110 = vmatmul.bf16.gmra.mxu0 %v1097
        %v1111 = vpop.f32.mrf.mxu0
        %v1112 = vadd.f32 0.0, %v1111
        %v1113 = vpop.f32.mrf.mxu0
        %1114 = vdwg.mxu0
        %v1116 = vsel %vm844, %v1053, 0
        %v1119 = vsel %vm976, %v1057, 0
        %1121 = vmatpush.bf16.msra.mxu0 0
        %1122 = vmatpush.bf16.msra.mxu0 0
        %1123 = vmatpush.bf16.msra.mxu0 0
        %1124 = vmatpush.bf16.msra.mxu0 0
        %1125 = vmatpush.bf16.msra.mxu0 0
        %1126 = vmatpush.bf16.msra.mxu0 0
        %1127 = vmatpush.bf16.msra.mxu0 0
        %1128 = vmatpush.bf16.msra.mxu0 %v1119
        %1129 = vmatmul.bf16.gmra.mxu0 %v1116
        %v1130 = vpop.f32.mrf.mxu0
        %v1131 = vadd.f32 0.0, %v1130
        %v1132 = vpop.f32.mrf.mxu0
        %1133 = vdwg.mxu0
        %v1134 = vsel %vm440, %v1074, 0.0
        %v1135 = vsel %vm440, %v1093, 0.0
        %v1136 = vadd.f32 %v1134, %v1135
        %v1137 = vsel %vm440, %v1112, 0.0
        %v1138 = vadd.f32 %v1136, %v1137
        %v1139 = vsel %vm440, %v1131, 0.0
        %v1140 = vadd.f32 %v1138, %v1139
        %v1141 = vadd.f32 %v1140, %v437
        %v1142 = vld [vmem:[%s3] sm:$0x1]
        %v1143 = vld [vmem:[%s4] sm:$0x1]
        %v1144 = vsel %vm440, %v1141, 0.0
        %1145 = vadd.xlane.f32.xlu0 %v1144
        %v1146 = vpop.xlane.xlu0 %1145
        %v1147 = vmul.f32 %v1146, %v450
        %v1148 = vsub.f32 %v1141, %v1147
        %v1149 = vmul.f32 %v1148, %v1148
        %v1150 = vsel %vm440, %v1149, 0.0
        %1151 = vadd.xlane.f32.xlu0 %v1150
        %v1152 = vpop.xlane.xlu0 %1151
        %v1153 = vmul.f32 %v1152, %v450
        %v1154 = vadd.f32 %v1153, 1e-05
        %v1155 = vrsqrt.pop %v1154
        %v1156 = vmul.f32 %v1155, %v1154
        %v1157 = vmul.f32 %v1156, %v1155
        %v1158 = vmul.f32 0.5, %v1157
        %v1159 = vsub.f32 1.5, %v1158
        %v1160 = vmul.f32 %v1155, %v1159
        %vm1161 = vweird.f32 %v1154
        %vm1162 = vweird.f32 %v1155
        %vm1163 = vmor %vm1161, %vm1162
        %v1164 = vsel %vm1163, %v1155, %v1160
        %v1165 = vmul.f32 %v1148, %v1164
        %v1167 = vperm.slane %v1142, 0
        %v1169 = vmul.f32 %v1167, %v1165
        %v1171 = vperm.slane %v1143, 0
        %v1173 = vadd.f32 %v1169, %v1171
        %v1174 = vpack.c.bf16 %v1173, %v1173
        %v1175 = vld [vmem:[%s9] sm:$0xf]
        %v1176 = vld [vmem:[%s9 + $0x4] sm:$0xf]
        %v1177 = vld [vmem:[%s9 + $0x8] sm:$0xf]
        %v1178 = vld [vmem:[%s9 + $0xc] sm:$0xf]
        %v1179 = vld [vmem:[%s10] sm:$0x1]
        %v1181 = vperm.slane %v1179, 0
        %v1187 = vunpack.c.l.b16 %v1175
        %v1188 = vunpack.c.l.b16 %v1176
        %v1189 = vunpack.c.l.b16 %v1177
        %v1190 = vunpack.c.l.b16 %v1178
        %v1191 = vpack.c.b16 %v1188, %v1187
        %v1192 = vpack.c.b16 %v1190, %v1189
        %v1196 = vsel %vm440, %v1174, 0
        %1198 = vmatpush.bf16.msra.mxu0 0
        %1199 = vmatpush.bf16.msra.mxu0 0
        %1200 = vmatpush.bf16.msra.mxu0 0
        %1201 = vmatpush.bf16.msra.mxu0 0
        %1202 = vmatpush.bf16.msra.mxu0 0
        %1203 = vmatpush.bf16.msra.mxu0 0
        %1204 = vmatpush.bf16.msra.mxu0 %v1192
        %1205 = vmatpush.bf16.msra.mxu0 %v1191
        %1206 = vmatmul.bf16.gmra.mxu0 %v1196
        %v1207 = vpop.f32.mrf.mxu0
        %v1208 = vadd.f32 %v1181, %v1207
        %v1209 = vpop.f32.mrf.mxu0
        %1210 = vdwg.mxu0
        %v1211 = vmul.f32 %v1208, 0.5
        %v1212 = vmul.f32 %v1208, %v1208
        %v1213 = vmul.f32 %v1208, %v1212
        %v1214 = vmul.f32 %v1213, 0.044715
        %v1215 = vadd.f32 %v1208, %v1214
        %v1216 = vmul.f32 %v1215, 0.7978846
        %v1217 = vtanh.pop %v1216
        %v1218 = vadd.f32 %v1217, 1.0
        %v1219 = vmul.f32 %v1211, %v1218
        %v1220 = vpack.c.bf16 %v1219, %v1219
        %v1221 = vld [vmem:[%s11] sm:$0xf]
        %v1222 = vld [vmem:[%s11 + $0x4] sm:$0xf]
        %v1223 = vld [vmem:[%s11 + $0x8] sm:$0xf]
        %v1224 = vld [vmem:[%s11 + $0xc] sm:$0xf]
        %v1225 = vld [vmem:[%s11 + $0x10] sm:$0xf]
        %v1226 = vld [vmem:[%s11 + $0x14] sm:$0xf]
        %v1227 = vld [vmem:[%s11 + $0x18] sm:$0xf]
        %v1228 = vld [vmem:[%s11 + $0x1c] sm:$0xf]
        %v1229 = vld [vmem:[%s11 + $0x20] sm:$0xf]
        %v1230 = vld [vmem:[%s11 + $0x24] sm:$0xf]
        %v1231 = vld [vmem:[%s11 + $0x28] sm:$0xf]
        %v1232 = vld [vmem:[%s11 + $0x2c] sm:$0xf]
        %v1233 = vld [vmem:[%s11 + $0x30] sm:$0xf]
        %v1234 = vld [vmem:[%s11 + $0x34] sm:$0xf]
        %v1235 = vld [vmem:[%s11 + $0x38] sm:$0xf]
        %v1236 = vld [vmem:[%s11 + $0x3c] sm:$0xf]
        %v1237 = vld [vmem:[%s12] sm:$0x1]
        %v1239 = vperm.slane %v1237, 0
        %v1257 = vunpack.c.l.b16 %v1221
        %v1258 = vunpack.c.l.b16 %v1222
        %v1259 = vunpack.c.l.b16 %v1223
        %v1260 = vunpack.c.l.b16 %v1224
        %v1261 = vunpack.c.l.b16 %v1225
        %v1262 = vunpack.c.l.b16 %v1226
        %v1263 = vunpack.c.l.b16 %v1227
        %v1264 = vunpack.c.l.b16 %v1228
        %v1265 = vunpack.c.l.b16 %v1229
        %v1266 = vunpack.c.l.b16 %v1230
        %v1267 = vunpack.c.l.b16 %v1231
        %v1268 = vunpack.c.l.b16 %v1232
        %v1269 = vunpack.c.l.b16 %v1233
        %v1270 = vunpack.c.l.b16 %v1234
        %v1271 = vunpack.c.l.b16 %v1235
        %v1272 = vunpack.c.l.b16 %v1236
        %v1273 = vpack.c.b16 %v1258, %v1257
        %v1274 = vpack.c.b16 %v1260, %v1259
        %v1275 = vpack.c.b16 %v1262, %v1261
        %v1276 = vpack.c.b16 %v1264, %v1263
        %v1277 = vpack.c.b16 %v1266, %v1265
        %v1278 = vpack.c.b16 %v1268, %v1267
        %v1279 = vpack.c.b16 %v1270, %v1269
        %v1280 = vpack.c.b16 %v1272, %v1271
        %1289 = vmatpush.bf16.msra.mxu0 %v1280
        %1290 = vmatpush.bf16.msra.mxu0 %v1279
        %1291 = vmatpush.bf16.msra.mxu0 %v1278
        %1292 = vmatpush.bf16.msra.mxu0 %v1277
        %1293 = vmatpush.bf16.msra.mxu0 %v1276
        %1294 = vmatpush.bf16.msra.mxu0 %v1275
        %1295 = vmatpush.bf16.msra.mxu0 %v1274
        %1296 = vmatpush.bf16.msra.mxu0 %v1273
        %1297 = vmatmul.bf16.gmra.mxu0 %v1220
        %v1298 = vpop.f32.mrf.mxu0
        %v1299 = vadd.f32 %v1239, %v1298
        %v1300 = vpop.f32.mrf.mxu0
        %1301 = vdwg.mxu0
        %v1302 = vadd.f32 %v1299, %v1141
        %1303 = vst.msk [vmem:[%s431] sm:$0xff] %vm440, %v1302
        %s1304 = sand.u32 %s313, 1
        %s1305 = scalar_lea.sflag [#allocation3], %s1304
        %s1306 = sand.u32 %s313, 1
        %s1307 = smul.addr %s1306, 8
        %s1308 = scalar_lea.vmem [#allocation2], %s1307
        // Predicated region
        $region73: #{tpu_custom_call.1} parent=71 // pred_check
          %p1309 = pneg %p323
        $region74: #{tpu_custom_call.1} parent=71 // pred_check_branch
          %1311 = sbr.rel (%p1309) target = $region76
        $region75: #{tpu_custom_call.1} parent=71 // pred_region
          %1313 = vsyncadd %s1305, 0
          %s1314 = smul.addr %s27, 8
          %s1315 = scalar_lea.hbm %s13, %s1314
          %s1317 = sshll.u32 %s1308, 4
          %s1318 = int_to_ptr.vmem [resolvable:$true] %s1317
          %s1319 = sshll.u32 %s1315, 4
          %s1320 = int_to_ptr.hbm [resolvable:$true] %s1319
          %1322 = dma.vmem_to_hbm [thread:$0]  %s1318, 128, %s1320, %s1305
        $region76: #{tpu_custom_call.1} parent=71 // pred_fallthru
          _
      $region72: #{tpu_custom_call.1} parent=5 // pred_fallthru
        _
      %p1323 = scmp.le.s32.totalorder 2, %s22
      // Predicated region
      $region77: #{tpu_custom_call.1} parent=5 // pred_check
        %p1324 = pneg %p1323
      $region78: #{tpu_custom_call.1} parent=5 // pred_check_branch
        %1326 = sbr.rel (%p1324) target = $region80
      $region79: #{tpu_custom_call.1} parent=5 // pred_region
        %s1327 = ssub.s32 %s22, 2
        // Predicated region
        $region81: #{tpu_custom_call.1} parent=79 // pred_check
          %p1328 = pneg %p329
        $region82: #{tpu_custom_call.1} parent=79 // pred_check_branch
          %1330 = sbr.rel (%p1328) target = $region84
        $region83: #{tpu_custom_call.1} parent=79 // pred_region
          %s1331 = sand.u32 %s314, 1
          %s1332 = scalar_lea.sflag [#allocation3], %s1331
          %s1333 = sand.u32 %s314, 1
          %s1334 = smul.addr %s1333, 8
          %s1335 = scalar_lea.vmem [#allocation2], %s1334
          %1337 = dma.done %s1332, 128
        $region84: #{tpu_custom_call.1} parent=79 // pred_fallthru
          _
      $region80: #{tpu_custom_call.1} parent=5 // pred_fallthru
        _
    $region6: #{tpu_custom_call.1} parent=1 // loop_footer
      %s26 = sadd.s32 1, %s22
    $region7: #{tpu_custom_call.1} parent=1 // loop_footer_branch
      %21 = sbr.rel target = $region3
    $region8: #{tpu_custom_call.1} parent=1 // loop_exit
      _
    %1338 = vsyncpa [#allocation3], 1
    %s1339 = scalar_lea.sflag [#allocation3], 1
    %1340 = vsyncpa %s1339, 1

</llo_original>
